<compile_context>
chip_gen: v5e
topology: v5e:2x2
jax: 0.10.0
libtpu: 0.0.40
codegen_flags: <defaults>
</compile_context>

<pallas_src>
import math

import jax
import jax.numpy as jnp
from jax.experimental import pallas as pl
from jax.experimental.pallas import tpu as pltpu


_LANE_CANDIDATES = (2048, 1024, 512, 256, 128)
# Double-buffered working set cap: 2 buffers * (8 in + 4 out) planes * f32.
_VMEM_WORKING_SET_BYTES = 40 << 20
# Scoped-VMEM limit handed to Mosaic (< 64 MiB physical per TC on v7x).
_VMEM_LIMIT_BYTES = 56 << 20


def sseir_kernel(params_ref, x_ref, preS_ref, preE_ref, preI_ref, preR_ref):
    # Scalars live in SMEM via scalar prefetch.
    beta = params_ref[0]
    sigma = params_ref[1]
    gamma = params_ref[2]
    one_m_sigma = 1.0 - sigma
    one_m_gamma = 1.0 - gamma

    S0 = x_ref[0]
    E0 = x_ref[1]
    I0 = x_ref[2]
    R0 = x_ref[3]
    S1 = x_ref[4]
    E1 = x_ref[5]
    I1 = x_ref[6]
    R1 = x_ref[7]

    N = S0 + E0 + I0 + R0
    # Exact reciprocal hoisted once: 3 divides -> 1 divide + multiplies.
    # (No N == 0 guard, matching the reference semantics.)
    invN = 1.0 / N
    bI1N = beta * I1 * invN  # shared by preS and preE

    preE_1 = one_m_sigma * E0 + beta * I0 * S0 * invN

    preS_ref[...] = (1.0 - bI1N) * S1
    preE_ref[...] = one_m_sigma * E1 + bI1N * S1
    preI_ref[...] = one_m_gamma * I1 + sigma * preE_1
    preR_ref[...] = R1 + gamma * I1


def _pick_lane(total):
    """Lane (last-dim) width: large multiple of 128, full-width tiles."""
    # Prefer an exact fit (no padding at all).
    for lane in _LANE_CANDIDATES:
        if total % (8 * lane) == 0:
            return lane
    # Otherwise the largest lane width that still leaves >= 1 real granule.
    for lane in _LANE_CANDIDATES:
        if total >= 8 * lane:
            return lane
    return 128


def _pick_tm(m, lane):
    """Sublane-dim tile: multiple of 8 dividing m, sized to the VMEM budget,
    keeping >= 4 grid steps when the problem is large enough (pipelining and
    v7x megacore sharding)."""
    cap = max(8, _VMEM_WORKING_SET_BYTES // (2 * 12 * 4 * lane))
    if m >= 32:
        cap = min(cap, m // 4)
    cap = min(cap, m)
    best = 8
    for tm in range(8, cap + 1, 8):
        if m % tm == 0:
            best = tm
    return best


def sseir_forward(params, x):
    """params: (3,) float32 [beta, sigma, gamma]; x: (8, *spatial) float32.

    Returns (preS, preE, preI, preR), each of shape `spatial`.
    """
    assert x.shape[0] == 8
    spatial = x.shape[1:]
    total = int(math.prod(spatial))

    lane = _pick_lane(total)
    granule = 8 * lane
    padded = ((total + granule - 1) // granule) * granule
    m = padded // lane
    tm = _pick_tm(m, lane)
    grid = (m // tm,)

    xf = x.reshape(8, total)  # contiguous reshape: free
    if padded != total:
        # Pad with ones so N != 0 in the dead tail (avoids spurious inf/nan
        # lanes); the tail is sliced off below.  No-op for aligned shapes.
        xf = jnp.pad(xf, ((0, 0), (0, padded - total)), constant_values=1.0)
    x3 = xf.reshape(8, m, lane)

    plane = jax.ShapeDtypeStruct((m, lane), x.dtype)
    outs = pl.pallas_call(
        sseir_kernel,
        out_shape=(plane, plane, plane, plane),
        grid_spec=pltpu.PrefetchScalarGridSpec(
            num_scalar_prefetch=1,  # params -> SMEM before the grid runs
            grid=grid,
            in_specs=[
                pl.BlockSpec((8, tm, lane), lambda i, p: (0, i, 0)),
            ],
            out_specs=[
                pl.BlockSpec((tm, lane), lambda i, p: (i, 0))
                for _ in range(4)
            ],
        ),
        compiler_params=pltpu.CompilerParams(
            dimension_semantics=("parallel",),
            vmem_limit_bytes=_VMEM_LIMIT_BYTES,
        ),
    )(params, x3)

    results = []
    for o in outs:
        flat = o.reshape(padded)
        if padded != total:
            flat = flat[:total]
        results.append(flat.reshape(spatial))
    return tuple(results)


def sseir_reference(params, x):
    beta, sigma, gamma = params[0], params[1], params[2]
    S0, E0, I0, R0, S1, E1, I1, R1 = [x[i] for i in range(8)]
    N = S0 + E0 + I0 + R0
    preE_1 = (1.0 - sigma) * E0 + beta * I0 * S0 / N
    preS = (1.0 - beta * I1 / N) * S1
    preE = (1.0 - sigma) * E1 + beta * I1 * S1 / N
    preI = (1.0 - gamma) * I1 + sigma * preE_1
    preR = R1 + gamma * I1
    return preS, preE, preI, preR


if __name__ == "__main__":
    # Same parameter values as the PyTorch module's __init__.
    params = jnp.array([0.17, 0.2, 0.07], dtype=jnp.float32)

    # 8 compartments x (128, 1024) spatial: small, lane-dense, and exercises
    # the tiled 1-D grid (L=2048, M=64, TM=16 -> grid=(4,)).
    key = jax.random.PRNGKey(0)
    x = jax.random.uniform(
        key, (8, 128, 1024), dtype=jnp.float32, minval=0.5, maxval=2.0
    )

    outs = sseir_forward(params, x)
    outs = jax.block_until_ready(outs)

    refs = sseir_reference(params, x)
    for o, r in zip(outs, refs):
        assert o.shape == r.shape
        assert jnp.allclose(o, r, rtol=1e-5, atol=1e-5)

    print("KERNEL_OK")
</pallas_src>

<mosaic_0001>
module attributes {stable_mosaic.version = 11 : i64} {
  func.func @sseir_kernel(%arg0: i32, %arg1: memref<3xf32, #tpu.memory_space<smem>>, %arg2: memref<8x16x2048xf32, #tpu.memory_space<vmem>>, %arg3: memref<16x2048xf32, #tpu.memory_space<vmem>>, %arg4: memref<16x2048xf32, #tpu.memory_space<vmem>>, %arg5: memref<16x2048xf32, #tpu.memory_space<vmem>>, %arg6: memref<16x2048xf32, #tpu.memory_space<vmem>>) attributes {dimension_semantics = [#tpu.dimension_semantics<parallel>], iteration_bounds = array<i64: 4>, scalar_prefetch = 1 : i64, scratch_operands = 0 : i64, tpu.core_type = #tpu.core_type<tc>, window_params = [{transform_indices = @transform_0, window_bounds = array<i64: 8, 16, 2048>}, {transform_indices = @transform_1, window_bounds = array<i64: 16, 2048>}, {transform_indices = @transform_2, window_bounds = array<i64: 16, 2048>}, {transform_indices = @transform_3, window_bounds = array<i64: 16, 2048>}, {transform_indices = @transform_4, window_bounds = array<i64: 16, 2048>}]} {
    %c0 = arith.constant 0 : index
    %0 = memref.load %arg1[%c0] : memref<3xf32, #tpu.memory_space<smem>>
    %c1 = arith.constant 1 : index
    %1 = memref.load %arg1[%c1] : memref<3xf32, #tpu.memory_space<smem>>
    %c2 = arith.constant 2 : index
    %2 = memref.load %arg1[%c2] : memref<3xf32, #tpu.memory_space<smem>>
    %cst = arith.constant 1.000000e+00 : f32
    %3 = arith.subf %cst, %1 : f32
    %cst_0 = arith.constant 1.000000e+00 : f32
    %4 = arith.subf %cst_0, %2 : f32
    %c0_1 = arith.constant 0 : index
    %c0_2 = arith.constant 0 : index
    %c0_3 = arith.constant 0 : index
    %5 = vector.load %arg2[%c0_1, %c0_2, %c0_3] : memref<8x16x2048xf32, #tpu.memory_space<vmem>>, vector<1x16x2048xf32>
    %6 = vector.shape_cast %5 : vector<1x16x2048xf32> to vector<16x2048xf32>
    %c1_4 = arith.constant 1 : index
    %c0_5 = arith.constant 0 : index
    %c0_6 = arith.constant 0 : index
    %7 = vector.load %arg2[%c1_4, %c0_5, %c0_6] : memref<8x16x2048xf32, #tpu.memory_space<vmem>>, vector<1x16x2048xf32>
    %8 = vector.shape_cast %7 : vector<1x16x2048xf32> to vector<16x2048xf32>
    %c2_7 = arith.constant 2 : index
    %c0_8 = arith.constant 0 : index
    %c0_9 = arith.constant 0 : index
    %9 = vector.load %arg2[%c2_7, %c0_8, %c0_9] : memref<8x16x2048xf32, #tpu.memory_space<vmem>>, vector<1x16x2048xf32>
    %10 = vector.shape_cast %9 : vector<1x16x2048xf32> to vector<16x2048xf32>
    %c3 = arith.constant 3 : index
    %c0_10 = arith.constant 0 : index
    %c0_11 = arith.constant 0 : index
    %11 = vector.load %arg2[%c3, %c0_10, %c0_11] : memref<8x16x2048xf32, #tpu.memory_space<vmem>>, vector<1x16x2048xf32>
    %12 = vector.shape_cast %11 : vector<1x16x2048xf32> to vector<16x2048xf32>
    %c4 = arith.constant 4 : index
    %c0_12 = arith.constant 0 : index
    %c0_13 = arith.constant 0 : index
    %13 = vector.load %arg2[%c4, %c0_12, %c0_13] : memref<8x16x2048xf32, #tpu.memory_space<vmem>>, vector<1x16x2048xf32>
    %14 = vector.shape_cast %13 : vector<1x16x2048xf32> to vector<16x2048xf32>
    %c5 = arith.constant 5 : index
    %c0_14 = arith.constant 0 : index
    %c0_15 = arith.constant 0 : index
    %15 = vector.load %arg2[%c5, %c0_14, %c0_15] : memref<8x16x2048xf32, #tpu.memory_space<vmem>>, vector<1x16x2048xf32>
    %16 = vector.shape_cast %15 : vector<1x16x2048xf32> to vector<16x2048xf32>
    %c6 = arith.constant 6 : index
    %c0_16 = arith.constant 0 : index
    %c0_17 = arith.constant 0 : index
    %17 = vector.load %arg2[%c6, %c0_16, %c0_17] : memref<8x16x2048xf32, #tpu.memory_space<vmem>>, vector<1x16x2048xf32>
    %18 = vector.shape_cast %17 : vector<1x16x2048xf32> to vector<16x2048xf32>
    %c7 = arith.constant 7 : index
    %c0_18 = arith.constant 0 : index
    %c0_19 = arith.constant 0 : index
    %19 = vector.load %arg2[%c7, %c0_18, %c0_19] : memref<8x16x2048xf32, #tpu.memory_space<vmem>>, vector<1x16x2048xf32>
    %20 = vector.shape_cast %19 : vector<1x16x2048xf32> to vector<16x2048xf32>
    %21 = arith.addf %6, %8 : vector<16x2048xf32>
    %22 = arith.addf %21, %10 : vector<16x2048xf32>
    %23 = arith.addf %22, %12 : vector<16x2048xf32>
    %cst_20 = arith.constant 1.000000e+00 : f32
    %24 = vector.broadcast %cst_20 : f32 to vector<16x2048xf32>
    %25 = arith.divf %24, %23 : vector<16x2048xf32>
    %26 = vector.broadcast %0 : f32 to vector<16x2048xf32>
    %27 = arith.mulf %26, %18 : vector<16x2048xf32>
    %28 = arith.mulf %27, %25 : vector<16x2048xf32>
    %29 = vector.broadcast %3 : f32 to vector<16x2048xf32>
    %30 = arith.mulf %29, %8 : vector<16x2048xf32>
    %31 = vector.broadcast %0 : f32 to vector<16x2048xf32>
    %32 = arith.mulf %31, %10 : vector<16x2048xf32>
    %33 = arith.mulf %32, %6 : vector<16x2048xf32>
    %34 = arith.mulf %33, %25 : vector<16x2048xf32>
    %35 = arith.addf %30, %34 : vector<16x2048xf32>
    %cst_21 = arith.constant 1.000000e+00 : f32
    %36 = vector.broadcast %cst_21 : f32 to vector<16x2048xf32>
    %37 = arith.subf %36, %28 : vector<16x2048xf32>
    %38 = arith.mulf %37, %14 : vector<16x2048xf32>
    %c0_22 = arith.constant 0 : index
    %c0_23 = arith.constant 0 : index
    %39 = vector.load %arg3[%c0_22, %c0_23] : memref<16x2048xf32, #tpu.memory_space<vmem>>, vector<16x2048xf32>
    tpu.vector_store %arg3[%c0_22, %c0_23], %38 {strides = array<i32>} : memref<16x2048xf32, #tpu.memory_space<vmem>>, vector<16x2048xf32>,
    %40 = vector.broadcast %3 : f32 to vector<16x2048xf32>
    %41 = arith.mulf %40, %16 : vector<16x2048xf32>
    %42 = arith.mulf %28, %14 : vector<16x2048xf32>
    %43 = arith.addf %41, %42 : vector<16x2048xf32>
    %c0_24 = arith.constant 0 : index
    %c0_25 = arith.constant 0 : index
    %44 = vector.load %arg4[%c0_24, %c0_25] : memref<16x2048xf32, #tpu.memory_space<vmem>>, vector<16x2048xf32>
    tpu.vector_store %arg4[%c0_24, %c0_25], %43 {strides = array<i32>} : memref<16x2048xf32, #tpu.memory_space<vmem>>, vector<16x2048xf32>,
    %45 = vector.broadcast %4 : f32 to vector<16x2048xf32>
    %46 = arith.mulf %45, %18 : vector<16x2048xf32>
    %47 = vector.broadcast %1 : f32 to vector<16x2048xf32>
    %48 = arith.mulf %47, %35 : vector<16x2048xf32>
    %49 = arith.addf %46, %48 : vector<16x2048xf32>
    %c0_26 = arith.constant 0 : index
    %c0_27 = arith.constant 0 : index
    %50 = vector.load %arg5[%c0_26, %c0_27] : memref<16x2048xf32, #tpu.memory_space<vmem>>, vector<16x2048xf32>
    tpu.vector_store %arg5[%c0_26, %c0_27], %49 {strides = array<i32>} : memref<16x2048xf32, #tpu.memory_space<vmem>>, vector<16x2048xf32>,
    %51 = vector.broadcast %2 : f32 to vector<16x2048xf32>
    %52 = arith.mulf %51, %18 : vector<16x2048xf32>
    %53 = arith.addf %20, %52 : vector<16x2048xf32>
    %c0_28 = arith.constant 0 : index
    %c0_29 = arith.constant 0 : index
    %54 = vector.load %arg6[%c0_28, %c0_29] : memref<16x2048xf32, #tpu.memory_space<vmem>>, vector<16x2048xf32>
    tpu.vector_store %arg6[%c0_28, %c0_29], %53 {strides = array<i32>} : memref<16x2048xf32, #tpu.memory_space<vmem>>, vector<16x2048xf32>,
    return
  }
  func.func @transform_0(%arg0: i32, %arg1: memref<3xf32, #tpu.memory_space<smem>>) -> (i32, i32, i32) {
    %c0_i32 = arith.constant 0 : i32
    %c0_i32_0 = arith.constant 0 : i32
    %c0_i32_1 = arith.constant 0 : i32
    return %c0_i32, %arg0, %c0_i32_0 : i32, i32, i32
  }
  func.func @transform_1(%arg0: i32, %arg1: memref<3xf32, #tpu.memory_space<smem>>) -> (i32, i32) {
    %c0_i32 = arith.constant 0 : i32
    %c0_i32_0 = arith.constant 0 : i32
    return %arg0, %c0_i32 : i32, i32
  }
  func.func @transform_2(%arg0: i32, %arg1: memref<3xf32, #tpu.memory_space<smem>>) -> (i32, i32) {
    %c0_i32 = arith.constant 0 : i32
    %c0_i32_0 = arith.constant 0 : i32
    return %arg0, %c0_i32 : i32, i32
  }
  func.func @transform_3(%arg0: i32, %arg1: memref<3xf32, #tpu.memory_space<smem>>) -> (i32, i32) {
    %c0_i32 = arith.constant 0 : i32
    %c0_i32_0 = arith.constant 0 : i32
    return %arg0, %c0_i32 : i32, i32
  }
  func.func @transform_4(%arg0: i32, %arg1: memref<3xf32, #tpu.memory_space<smem>>) -> (i32, i32) {
    %c0_i32 = arith.constant 0 : i32
    %c0_i32_0 = arith.constant 0 : i32
    return %arg0, %c0_i32 : i32, i32
  }
}

</mosaic_0001>

<llo_original>
// kernel: tpu_custom_call.1
$region0: #{tpu_custom_call.1}
  #allocation0 [shape = 'u32[]', space=smem, size = 0x4, offset = 0x4, fixed_abs, tag = 'smem constant byte address 0x4 - core index']
  #allocation1 [shape = 'u32[72,128]{1,0:T(1,128)}', space=vmem, size = 0x9000, scoped, tag = 'internal scratch']
  #allocation2 [shape = 's32[1]{0}', space=sflag, size = 0x4, scoped, tag = 'scoped memory for tpu_custom_call.1']
  #allocation3 [shape = 'u8[512]{0}', space=smem, size = 0x200, scoped, tag = 'prefetched SMEM operand 0']
  #allocation13 [shape = 's32[]', space=sflag, size = 0x4, offset = 0, fixed_abs, tag = 'sflag constant byte address 0x0 - dummy sync flag']
  %s0 = inlined_call_operand.hbm [shape: f32[3], index: 0, kind: input, shape index: {}]
  %s1 = inlined_call_operand.hbm [shape: f32[8,64,2048], index: 1, kind: input, shape index: {}]
  %s2 = inlined_call_operand.hbm [shape: f32[64,2048], index: 2, kind: output, shape index: {0}]
  %s3 = inlined_call_operand.hbm [shape: f32[64,2048], index: 3, kind: output, shape index: {1}]
  %s4 = inlined_call_operand.hbm [shape: f32[64,2048], index: 4, kind: output, shape index: {2}]
  %s5 = inlined_call_operand.hbm [shape: f32[64,2048], index: 5, kind: output, shape index: {3}]
  %6 = xla_tuple %s2, %s3, %s4, %s5
  %s7 = sld [smem:[#allocation0]]
  $region65: #{tpu_custom_call.1} parent=0
    _
  %s9 = ssub.s32 1, %s7
  %s10 = scalar_select 0, %s9, %s7
  %s12 = sshll.u32 %s0, 4
  %s13 = int_to_ptr.hbm [resolvable:$true] %s12
  %15 = dma.hbm_to_smem %s13, 16, [#allocation3], [#allocation2]
  %17 = dma.done [#allocation2], 16
  %18 = sfence
  $region1: #{tpu_custom_call.1} parent=0
    #allocation4 [shape = 'u8[2097152]{0}', space=vmem, size = 0x200000, scoped, tag = 'input window, operand 1']
    #allocation5 [shape = 's32[2]{0}', space=sflag, size = 0x8, scoped, tag = 'scoped memory for tpu_custom_call.1']
    #allocation6 [shape = 's32[2]{0}', space=sflag, size = 0x8, scoped, tag = 'scoped memory for tpu_custom_call.1']
    #allocation7 [shape = 'u8[262144]{0}', space=vmem, size = 0x40000, scoped, tag = 'output window, operand 0']
    #allocation8 [shape = 'u8[262144]{0}', space=vmem, size = 0x40000, scoped, tag = 'output window, operand 1']
    #allocation9 [shape = 's32[2]{0}', space=sflag, size = 0x8, scoped, tag = 'scoped memory for tpu_custom_call.1']
    #allocation10 [shape = 'u8[262144]{0}', space=vmem, size = 0x40000, scoped, tag = 'output window, operand 2']
    #allocation11 [shape = 'u8[262144]{0}', space=vmem, size = 0x40000, scoped, tag = 'output window, operand 3']
    #allocation12 [shape = 's32[2]{0}', space=sflag, size = 0x8, scoped, tag = 'scoped memory for tpu_custom_call.1']
    %19 = vsyncpa [#allocation5], 0
    %s20 = scalar_lea.sflag [#allocation5], 1
    %21 = vsyncpa %s20, 0
    %22 = vsyncpa [#allocation6], 0
    %s23 = scalar_lea.sflag [#allocation6], 1
    %24 = vsyncpa %s23, 0
    %25 = vsyncpa [#allocation9], 0
    %s26 = scalar_lea.sflag [#allocation9], 1
    %27 = vsyncpa %s26, 0
    %28 = vsyncpa [#allocation12], 0
    %s29 = scalar_lea.sflag [#allocation12], 1
    %30 = vsyncpa %s29, 0
    loop: start=0, step=1, limit=6
    $region2: #{tpu_custom_call.1} parent=1 // loop_pre_header
      _
    $region3: #{tpu_custom_call.1} parent=1 // loop_header
      %s32 = sphi 0, %s36
      %p33 = scmp.ge.s32.totalorder %s32, 6
      %s42 = sphi 0, %s44
      %s45 = sphi 0, %s42
      %s46 = sphi 0, %s45
      %s62 = sphi 0, %s46
      %s68 = sphi 0, %s70
      %s71 = sphi 0, %s68
      %s72 = sphi 0, %s71
      %s88 = sphi 0, %s72
      %s94 = sphi 0, %s96
      %s97 = sphi 0, %s94
      %s98 = sphi 0, %s97
      %s114 = sphi 0, %s98
      %s120 = sphi 0, %s122
      %s123 = sphi 0, %s120
      %s124 = sphi 0, %s123
      %s140 = sphi 0, %s124
      %s146 = sphi 0, %s148
      %s149 = sphi 0, %s146
      %s150 = sphi 0, %s149
      %s166 = sphi 0, %s150
    $region4: #{tpu_custom_call.1} parent=1 // loop_header_branch
      %35 = sbr.rel (%p33) target = $region8
    $region5: #{tpu_custom_call.1} parent=1 // loop_body
      %s37 = ssub.s32 %s32, 1
      %s38 = ssub.s32 %s32, 2
      %s39 = sadd.s32 %s32, 1
      %s40 = ssub.s32 %s32, %s39
      %p41 = scmp.eq.s32.totalorder %s40, 0
      %s43 = sadd.s32 %s42, 1
      %s44 = scalar_select %p41, %s42, %s43
      %p47 = pneg %p41
      %p48 = scmp.eq.s32.totalorder %s32, 3
      %p49 = por %p47, %p48
      %p50 = scmp.ne.s32.totalorder %s42, %s45
      %p51 = scmp.eq.s32.totalorder %s32, 0
      %p52 = por %p50, %p51
      %p53 = scmp.ne.s32.totalorder %s42, %s45
      %p54 = scmp.eq.s32.totalorder %s37, 3
      %p55 = por %p53, %p54
      %p56 = scmp.ne.s32.totalorder %s45, %s46
      %p57 = scmp.eq.s32.totalorder %s37, 0
      %p58 = por %p56, %p57
      %p59 = scmp.ne.s32.totalorder %s45, %s46
      %p60 = scmp.eq.s32.totalorder %s38, 3
      %p61 = por %p59, %p60
      %p63 = scmp.ne.s32.totalorder %s46, %s62
      %p64 = scmp.eq.s32.totalorder %s38, 0
      %p65 = por %p63, %p64
      %s66 = ssub.s32 %s32, %s39
      %p67 = scmp.eq.s32.totalorder %s66, 0
      %s69 = sadd.s32 %s68, 1
      %s70 = scalar_select %p67, %s68, %s69
      %p73 = pneg %p67
      %p74 = scmp.eq.s32.totalorder %s32, 3
      %p75 = por %p73, %p74
      %p76 = scmp.ne.s32.totalorder %s68, %s71
      %p77 = scmp.eq.s32.totalorder %s32, 0
      %p78 = por %p76, %p77
      %p79 = scmp.ne.s32.totalorder %s68, %s71
      %p80 = scmp.eq.s32.totalorder %s37, 3
      %p81 = por %p79, %p80
      %p82 = scmp.ne.s32.totalorder %s71, %s72
      %p83 = scmp.eq.s32.totalorder %s37, 0
      %p84 = por %p82, %p83
      %p85 = scmp.ne.s32.totalorder %s71, %s72
      %p86 = scmp.eq.s32.totalorder %s38, 3
      %p87 = por %p85, %p86
      %p89 = scmp.ne.s32.totalorder %s72, %s88
      %p90 = scmp.eq.s32.totalorder %s38, 0
      %p91 = por %p89, %p90
      %s92 = ssub.s32 %s32, %s39
      %p93 = scmp.eq.s32.totalorder %s92, 0
      %s95 = sadd.s32 %s94, 1
      %s96 = scalar_select %p93, %s94, %s95
      %p99 = pneg %p93
      %p100 = scmp.eq.s32.totalorder %s32, 3
      %p101 = por %p99, %p100
      %p102 = scmp.ne.s32.totalorder %s94, %s97
      %p103 = scmp.eq.s32.totalorder %s32, 0
      %p104 = por %p102, %p103
      %p105 = scmp.ne.s32.totalorder %s94, %s97
      %p106 = scmp.eq.s32.totalorder %s37, 3
      %p107 = por %p105, %p106
      %p108 = scmp.ne.s32.totalorder %s97, %s98
      %p109 = scmp.eq.s32.totalorder %s37, 0
      %p110 = por %p108, %p109
      %p111 = scmp.ne.s32.totalorder %s97, %s98
      %p112 = scmp.eq.s32.totalorder %s38, 3
      %p113 = por %p111, %p112
      %p115 = scmp.ne.s32.totalorder %s98, %s114
      %p116 = scmp.eq.s32.totalorder %s38, 0
      %p117 = por %p115, %p116
      %s118 = ssub.s32 %s32, %s39
      %p119 = scmp.eq.s32.totalorder %s118, 0
      %s121 = sadd.s32 %s120, 1
      %s122 = scalar_select %p119, %s120, %s121
      %p125 = pneg %p119
      %p126 = scmp.eq.s32.totalorder %s32, 3
      %p127 = por %p125, %p126
      %p128 = scmp.ne.s32.totalorder %s120, %s123
      %p129 = scmp.eq.s32.totalorder %s32, 0
      %p130 = por %p128, %p129
      %p131 = scmp.ne.s32.totalorder %s120, %s123
      %p132 = scmp.eq.s32.totalorder %s37, 3
      %p133 = por %p131, %p132
      %p134 = scmp.ne.s32.totalorder %s123, %s124
      %p135 = scmp.eq.s32.totalorder %s37, 0
      %p136 = por %p134, %p135
      %p137 = scmp.ne.s32.totalorder %s123, %s124
      %p138 = scmp.eq.s32.totalorder %s38, 3
      %p139 = por %p137, %p138
      %p141 = scmp.ne.s32.totalorder %s124, %s140
      %p142 = scmp.eq.s32.totalorder %s38, 0
      %p143 = por %p141, %p142
      %s144 = ssub.s32 %s32, %s39
      %p145 = scmp.eq.s32.totalorder %s144, 0
      %s147 = sadd.s32 %s146, 1
      %s148 = scalar_select %p145, %s146, %s147
      %p151 = pneg %p145
      %p152 = scmp.eq.s32.totalorder %s32, 3
      %p153 = por %p151, %p152
      %p154 = scmp.ne.s32.totalorder %s146, %s149
      %p155 = scmp.eq.s32.totalorder %s32, 0
      %p156 = por %p154, %p155
      %p157 = scmp.ne.s32.totalorder %s146, %s149
      %p158 = scmp.eq.s32.totalorder %s37, 3
      %p159 = por %p157, %p158
      %p160 = scmp.ne.s32.totalorder %s149, %s150
      %p161 = scmp.eq.s32.totalorder %s37, 0
      %p162 = por %p160, %p161
      %p163 = scmp.ne.s32.totalorder %s149, %s150
      %p164 = scmp.eq.s32.totalorder %s38, 3
      %p165 = por %p163, %p164
      %p167 = scmp.ne.s32.totalorder %s150, %s166
      %p168 = scmp.eq.s32.totalorder %s38, 0
      %p169 = por %p167, %p168
      %p170 = scmp.le.s32.totalorder 1, %s32
      %p171 = scmp.lt.s32.totalorder %s32, 5
      %p172 = pnand %p170, %p171
      %p173 = pneg %p172
      // Predicated region
      $region9: #{tpu_custom_call.1} parent=5 // pred_check
        _
      $region10: #{tpu_custom_call.1} parent=5 // pred_check_branch
        %175 = sbr.rel (%p172) target = $region12
      $region11: #{tpu_custom_call.1} parent=5 // pred_region
        %s176 = ssub.s32 %s32, 1
      $region12: #{tpu_custom_call.1} parent=5 // pred_fallthru
        _
      %p177 = scmp.lt.s32.totalorder %s32, 4
      // Predicated region
      $region13: #{tpu_custom_call.1} parent=5 // pred_check
        %p178 = pneg %p177
      $region14: #{tpu_custom_call.1} parent=5 // pred_check_branch
        %180 = sbr.rel (%p178) target = $region16
      $region15: #{tpu_custom_call.1} parent=5 // pred_region
        // Predicated region
        $region17: #{tpu_custom_call.1} parent=15 // pred_check
          %p181 = pneg %p52
        $region18: #{tpu_custom_call.1} parent=15 // pred_check_branch
          %183 = sbr.rel (%p181) target = $region20
        $region19: #{tpu_custom_call.1} parent=15 // pred_region
          #allocation14 [shape = 'u32[6]{0}', space=smem, size = 0x18, scoped, tag = 'DMA stride descriptor']
          %s184 = sand.u32 %s42, 1
          %s185 = scalar_lea.sflag [#allocation5], %s184
          %s186 = sand.u32 %s42, 1
          %s187 = smul.addr %s186, 2048
          %s188 = scalar_lea.vmem [#allocation4], %s187
          %s189 = smul.u32 2, %s32
          %191 = vsyncadd %s185, 0
          %s192 = smul.addr %s189, 16
          %s193 = smul.addr %s192, 8
          %s194 = scalar_lea.hbm %s1, %s193
          %s196 = sshll.u32 1, 14
          %s197 = sxor.u32 4294967295, %s196
          %s199 = sld [smem:[#allocation0]]
          %s200 = sadd.s32 2, %s199
          %s202 = sshll.u32 7, 26
          %s203 = sxor.u32 4294967295, %s202
          %s204 = sand.u32 0, %s203
          %s205 = sshll.u32 %s200, 26
          %s206 = sor.u32 %s204, %s205
          %s207 = sshll.u32 %s194, 4
          %s208 = int_to_ptr.hbm [resolvable:$true] %s207
          %s209 = sshll.u32 %s188, 4
          %s210 = int_to_ptr.vmem [resolvable:$true] %s209
          %216 = sst [smem:[#allocation14]] 16384
          %s217 = scalar_lea.smem [#allocation14], 1
          %218 = sst [smem:[%s217]] 4096
          %s219 = scalar_lea.smem [#allocation14], 2
          %220 = sst [smem:[%s219]] 2
          %s221 = scalar_lea.smem [#allocation14], 3
          %222 = sst [smem:[%s221]] 2048
          %s223 = scalar_lea.smem [#allocation14], 4
          %224 = sst [smem:[%s223]] 2048
          %s225 = scalar_lea.smem [#allocation14], 5
          %226 = sst [smem:[%s225]] 128
          %228 = dma.general %s208, 32768, %s210, %s185, [#allocation13], [#allocation14], %s206, 0
        $region20: #{tpu_custom_call.1} parent=15 // pred_fallthru
          _
      $region16: #{tpu_custom_call.1} parent=5 // pred_fallthru
        _
      %p229 = scmp.le.s32.totalorder 1, %s32
      %p230 = scmp.lt.s32.totalorder %s32, 5
      %p231 = pnand %p229, %p230
      %p232 = pneg %p231
      // Predicated region
      $region21: #{tpu_custom_call.1} parent=5 // pred_check
        _
      $region22: #{tpu_custom_call.1} parent=5 // pred_check_branch
        %234 = sbr.rel (%p231) target = $region24
      $region23: #{tpu_custom_call.1} parent=5 // pred_region
        %s235 = ssub.s32 %s32, 1
        %s236 = sand.u32 %s45, 1
        %s237 = scalar_lea.sflag [#allocation5], %s236
        %s238 = sand.u32 %s45, 1
        %s239 = smul.addr %s238, 2048
        %s240 = scalar_lea.vmem [#allocation4], %s239
        // Predicated region
        $region25: #{tpu_custom_call.1} parent=23 // pred_check
          %p241 = pneg %p58
        $region26: #{tpu_custom_call.1} parent=23 // pred_check_branch
          %243 = sbr.rel (%p241) target = $region28
        $region27: #{tpu_custom_call.1} parent=23 // pred_region
          %245 = dma.done %s237, 32768
        $region28: #{tpu_custom_call.1} parent=23 // pred_fallthru
          _
        %s246 = sand.u32 %s45, 1
        %s247 = scalar_lea.sflag [#allocation5], %s246
        %s248 = sand.u32 %s45, 1
        %s249 = smul.addr %s248, 2048
        %s250 = scalar_lea.vmem [#allocation4], %s249
        %p251 = pneg %p58
        %p252 = pneg %p55
        %p253 = pneg %p84
        %p254 = pneg %p81
        %s255 = sand.u32 %s71, 1
        %s256 = scalar_lea.sflag [#allocation6], %s255
        %s257 = sand.u32 %s71, 1
        %s258 = smul.addr %s257, 256
        %s259 = scalar_lea.vmem [#allocation7], %s258
        %p260 = pneg %p110
        %p261 = pneg %p107
        %s262 = sand.u32 %s37, 1
        %s263 = scalar_lea.sflag [#allocation9], %s262
        %s264 = sand.u32 %s97, 1
        %s265 = smul.addr %s264, 256
        %s266 = scalar_lea.vmem [#allocation8], %s265
        %p267 = pneg %p136
        %p268 = pneg %p133
        %s269 = sand.u32 %s37, 1
        %s270 = scalar_lea.sflag [#allocation9], %s269
        %s271 = sand.u32 %s123, 1
        %s272 = smul.addr %s271, 256
        %s273 = scalar_lea.vmem [#allocation10], %s272
        %p274 = pneg %p162
        %p275 = pneg %p159
        %s276 = sand.u32 %s149, 1
        %s277 = scalar_lea.sflag [#allocation12], %s276
        %s278 = sand.u32 %s149, 1
        %s279 = smul.addr %s278, 256
        %s280 = scalar_lea.vmem [#allocation11], %s279
        %s281 = smul.u32 2, %s37
        %s282 = smul.u32 2, %s37
        %s283 = smul.u32 2, %s37
        %s284 = smul.u32 2, %s37
        %s285 = smul.u32 2, %s37
        %s286 = sld [smem:[#allocation3]]
        %s287 = sld [smem:[#allocation3 + $0x1]]
        %s288 = sld [smem:[#allocation3 + $0x2]]
        %s289 = ssub.f32 1.0, %s287
        %s290 = ssub.f32 1.0, %s288
        %v291 = vld [vmem:[%s240] sm:$0xff]
        %v292 = vld [vmem:[%s240 + $0x8] sm:$0xff]
        %v293 = vld [vmem:[%s240 + $0x10] sm:$0xff]
        %v294 = vld [vmem:[%s240 + $0x18] sm:$0xff]
        %v295 = vld [vmem:[%s240 + $0x20] sm:$0xff]
        %v296 = vld [vmem:[%s240 + $0x28] sm:$0xff]
        %v297 = vld [vmem:[%s240 + $0x30] sm:$0xff]
        %v298 = vld [vmem:[%s240 + $0x38] sm:$0xff]
        %v299 = vld [vmem:[%s240 + $0x40] sm:$0xff]
        %v300 = vld [vmem:[%s240 + $0x48] sm:$0xff]
        %v301 = vld [vmem:[%s240 + $0x50] sm:$0xff]
        %v302 = vld [vmem:[%s240 + $0x58] sm:$0xff]
        %v303 = vld [vmem:[%s240 + $0x60] sm:$0xff]
        %v304 = vld [vmem:[%s240 + $0x68] sm:$0xff]
        %v305 = vld [vmem:[%s240 + $0x70] sm:$0xff]
        %v306 = vld [vmem:[%s240 + $0x78] sm:$0xff]
        %v307 = vld [vmem:[%s240 + $0x80] sm:$0xff]
        %v308 = vld [vmem:[%s240 + $0x88] sm:$0xff]
        %v309 = vld [vmem:[%s240 + $0x90] sm:$0xff]
        %v310 = vld [vmem:[%s240 + $0x98] sm:$0xff]
        %v311 = vld [vmem:[%s240 + $0xa0] sm:$0xff]
        %v312 = vld [vmem:[%s240 + $0xa8] sm:$0xff]
        %v313 = vld [vmem:[%s240 + $0xb0] sm:$0xff]
        %v314 = vld [vmem:[%s240 + $0xb8] sm:$0xff]
        %v315 = vld [vmem:[%s240 + $0xc0] sm:$0xff]
        %v316 = vld [vmem:[%s240 + $0xc8] sm:$0xff]
        %v317 = vld [vmem:[%s240 + $0xd0] sm:$0xff]
        %v318 = vld [vmem:[%s240 + $0xd8] sm:$0xff]
        %v319 = vld [vmem:[%s240 + $0xe0] sm:$0xff]
        %v320 = vld [vmem:[%s240 + $0xe8] sm:$0xff]
        %v321 = vld [vmem:[%s240 + $0xf0] sm:$0xff]
        %v322 = vld [vmem:[%s240 + $0xf8] sm:$0xff]
        %s323 = scalar_lea.vmem %s240, 256 [#allocation4]
        %v324 = vld [vmem:[%s323] sm:$0xff]
        %v325 = vld [vmem:[%s323 + $0x8] sm:$0xff]
        %v326 = vld [vmem:[%s323 + $0x10] sm:$0xff]
        %v327 = vld [vmem:[%s323 + $0x18] sm:$0xff]
        %v328 = vld [vmem:[%s323 + $0x20] sm:$0xff]
        %v329 = vld [vmem:[%s323 + $0x28] sm:$0xff]
        %v330 = vld [vmem:[%s323 + $0x30] sm:$0xff]
        %v331 = vld [vmem:[%s323 + $0x38] sm:$0xff]
        %v332 = vld [vmem:[%s323 + $0x40] sm:$0xff]
        %v333 = vld [vmem:[%s323 + $0x48] sm:$0xff]
        %v334 = vld [vmem:[%s323 + $0x50] sm:$0xff]
        %v335 = vld [vmem:[%s323 + $0x58] sm:$0xff]
        %v336 = vld [vmem:[%s323 + $0x60] sm:$0xff]
        %v337 = vld [vmem:[%s323 + $0x68] sm:$0xff]
        %v338 = vld [vmem:[%s323 + $0x70] sm:$0xff]
        %v339 = vld [vmem:[%s323 + $0x78] sm:$0xff]
        %v340 = vld [vmem:[%s323 + $0x80] sm:$0xff]
        %v341 = vld [vmem:[%s323 + $0x88] sm:$0xff]
        %v342 = vld [vmem:[%s323 + $0x90] sm:$0xff]
        %v343 = vld [vmem:[%s323 + $0x98] sm:$0xff]
        %v344 = vld [vmem:[%s323 + $0xa0] sm:$0xff]
        %v345 = vld [vmem:[%s323 + $0xa8] sm:$0xff]
        %v346 = vld [vmem:[%s323 + $0xb0] sm:$0xff]
        %v347 = vld [vmem:[%s323 + $0xb8] sm:$0xff]
        %v348 = vld [vmem:[%s323 + $0xc0] sm:$0xff]
        %v349 = vld [vmem:[%s323 + $0xc8] sm:$0xff]
        %v350 = vld [vmem:[%s323 + $0xd0] sm:$0xff]
        %v351 = vld [vmem:[%s323 + $0xd8] sm:$0xff]
        %v352 = vld [vmem:[%s323 + $0xe0] sm:$0xff]
        %v353 = vld [vmem:[%s323 + $0xe8] sm:$0xff]
        %v354 = vld [vmem:[%s323 + $0xf0] sm:$0xff]
        %v355 = vld [vmem:[%s323 + $0xf8] sm:$0xff]
        %s356 = scalar_lea.vmem %s240, 512 [#allocation4]
        %v357 = vld [vmem:[%s356] sm:$0xff]
        %v358 = vld [vmem:[%s356 + $0x8] sm:$0xff]
        %v359 = vld [vmem:[%s356 + $0x10] sm:$0xff]
        %v360 = vld [vmem:[%s356 + $0x18] sm:$0xff]
        %v361 = vld [vmem:[%s356 + $0x20] sm:$0xff]
        %v362 = vld [vmem:[%s356 + $0x28] sm:$0xff]
        %v363 = vld [vmem:[%s356 + $0x30] sm:$0xff]
        %v364 = vld [vmem:[%s356 + $0x38] sm:$0xff]
        %v365 = vld [vmem:[%s356 + $0x40] sm:$0xff]
        %v366 = vld [vmem:[%s356 + $0x48] sm:$0xff]
        %v367 = vld [vmem:[%s356 + $0x50] sm:$0xff]
        %v368 = vld [vmem:[%s356 + $0x58] sm:$0xff]
        %v369 = vld [vmem:[%s356 + $0x60] sm:$0xff]
        %v370 = vld [vmem:[%s356 + $0x68] sm:$0xff]
        %v371 = vld [vmem:[%s356 + $0x70] sm:$0xff]
        %v372 = vld [vmem:[%s356 + $0x78] sm:$0xff]
        %v373 = vld [vmem:[%s356 + $0x80] sm:$0xff]
        %v374 = vld [vmem:[%s356 + $0x88] sm:$0xff]
        %v375 = vld [vmem:[%s356 + $0x90] sm:$0xff]
        %v376 = vld [vmem:[%s356 + $0x98] sm:$0xff]
        %v377 = vld [vmem:[%s356 + $0xa0] sm:$0xff]
        %v378 = vld [vmem:[%s356 + $0xa8] sm:$0xff]
        %v379 = vld [vmem:[%s356 + $0xb0] sm:$0xff]
        %v380 = vld [vmem:[%s356 + $0xb8] sm:$0xff]
        %v381 = vld [vmem:[%s356 + $0xc0] sm:$0xff]
        %v382 = vld [vmem:[%s356 + $0xc8] sm:$0xff]
        %v383 = vld [vmem:[%s356 + $0xd0] sm:$0xff]
        %v384 = vld [vmem:[%s356 + $0xd8] sm:$0xff]
        %v385 = vld [vmem:[%s356 + $0xe0] sm:$0xff]
        %v386 = vld [vmem:[%s356 + $0xe8] sm:$0xff]
        %v387 = vld [vmem:[%s356 + $0xf0] sm:$0xff]
        %v388 = vld [vmem:[%s356 + $0xf8] sm:$0xff]
        %s389 = scalar_lea.vmem %s240, 768 [#allocation4]
        %v390 = vld [vmem:[%s389] sm:$0xff]
        %v391 = vld [vmem:[%s389 + $0x8] sm:$0xff]
        %v392 = vld [vmem:[%s389 + $0x10] sm:$0xff]
        %v393 = vld [vmem:[%s389 + $0x18] sm:$0xff]
        %v394 = vld [vmem:[%s389 + $0x20] sm:$0xff]
        %v395 = vld [vmem:[%s389 + $0x28] sm:$0xff]
        %v396 = vld [vmem:[%s389 + $0x30] sm:$0xff]
        %v397 = vld [vmem:[%s389 + $0x38] sm:$0xff]
        %v398 = vld [vmem:[%s389 + $0x40] sm:$0xff]
        %v399 = vld [vmem:[%s389 + $0x48] sm:$0xff]
        %v400 = vld [vmem:[%s389 + $0x50] sm:$0xff]
        %v401 = vld [vmem:[%s389 + $0x58] sm:$0xff]
        %v402 = vld [vmem:[%s389 + $0x60] sm:$0xff]
        %v403 = vld [vmem:[%s389 + $0x68] sm:$0xff]
        %v404 = vld [vmem:[%s389 + $0x70] sm:$0xff]
        %v405 = vld [vmem:[%s389 + $0x78] sm:$0xff]
        %v406 = vld [vmem:[%s389 + $0x80] sm:$0xff]
        %v407 = vld [vmem:[%s389 + $0x88] sm:$0xff]
        %v408 = vld [vmem:[%s389 + $0x90] sm:$0xff]
        %v409 = vld [vmem:[%s389 + $0x98] sm:$0xff]
        %v410 = vld [vmem:[%s389 + $0xa0] sm:$0xff]
        %v411 = vld [vmem:[%s389 + $0xa8] sm:$0xff]
        %v412 = vld [vmem:[%s389 + $0xb0] sm:$0xff]
        %v413 = vld [vmem:[%s389 + $0xb8] sm:$0xff]
        %v414 = vld [vmem:[%s389 + $0xc0] sm:$0xff]
        %v415 = vld [vmem:[%s389 + $0xc8] sm:$0xff]
        %v416 = vld [vmem:[%s389 + $0xd0] sm:$0xff]
        %v417 = vld [vmem:[%s389 + $0xd8] sm:$0xff]
        %v418 = vld [vmem:[%s389 + $0xe0] sm:$0xff]
        %v419 = vld [vmem:[%s389 + $0xe8] sm:$0xff]
        %v420 = vld [vmem:[%s389 + $0xf0] sm:$0xff]
        %v421 = vld [vmem:[%s389 + $0xf8] sm:$0xff]
        %s422 = scalar_lea.vmem %s240, 1024 [#allocation4]
        %v423 = vld [vmem:[%s422] sm:$0xff]
        %v424 = vld [vmem:[%s422 + $0x8] sm:$0xff]
        %v425 = vld [vmem:[%s422 + $0x10] sm:$0xff]
        %v426 = vld [vmem:[%s422 + $0x18] sm:$0xff]
        %v427 = vld [vmem:[%s422 + $0x20] sm:$0xff]
        %v428 = vld [vmem:[%s422 + $0x28] sm:$0xff]
        %v429 = vld [vmem:[%s422 + $0x30] sm:$0xff]
        %v430 = vld [vmem:[%s422 + $0x38] sm:$0xff]
        %v431 = vld [vmem:[%s422 + $0x40] sm:$0xff]
        %v432 = vld [vmem:[%s422 + $0x48] sm:$0xff]
        %v433 = vld [vmem:[%s422 + $0x50] sm:$0xff]
        %v434 = vld [vmem:[%s422 + $0x58] sm:$0xff]
        %v435 = vld [vmem:[%s422 + $0x60] sm:$0xff]
        %v436 = vld [vmem:[%s422 + $0x68] sm:$0xff]
        %v437 = vld [vmem:[%s422 + $0x70] sm:$0xff]
        %v438 = vld [vmem:[%s422 + $0x78] sm:$0xff]
        %v439 = vld [vmem:[%s422 + $0x80] sm:$0xff]
        %v440 = vld [vmem:[%s422 + $0x88] sm:$0xff]
        %v441 = vld [vmem:[%s422 + $0x90] sm:$0xff]
        %v442 = vld [vmem:[%s422 + $0x98] sm:$0xff]
        %v443 = vld [vmem:[%s422 + $0xa0] sm:$0xff]
        %v444 = vld [vmem:[%s422 + $0xa8] sm:$0xff]
        %v445 = vld [vmem:[%s422 + $0xb0] sm:$0xff]
        %v446 = vld [vmem:[%s422 + $0xb8] sm:$0xff]
        %v447 = vld [vmem:[%s422 + $0xc0] sm:$0xff]
        %v448 = vld [vmem:[%s422 + $0xc8] sm:$0xff]
        %v449 = vld [vmem:[%s422 + $0xd0] sm:$0xff]
        %v450 = vld [vmem:[%s422 + $0xd8] sm:$0xff]
        %v451 = vld [vmem:[%s422 + $0xe0] sm:$0xff]
        %v452 = vld [vmem:[%s422 + $0xe8] sm:$0xff]
        %v453 = vld [vmem:[%s422 + $0xf0] sm:$0xff]
        %v454 = vld [vmem:[%s422 + $0xf8] sm:$0xff]
        %s455 = scalar_lea.vmem %s240, 1280 [#allocation4]
        %v456 = vld [vmem:[%s455] sm:$0xff]
        %v457 = vld [vmem:[%s455 + $0x8] sm:$0xff]
        %v458 = vld [vmem:[%s455 + $0x10] sm:$0xff]
        %v459 = vld [vmem:[%s455 + $0x18] sm:$0xff]
        %v460 = vld [vmem:[%s455 + $0x20] sm:$0xff]
        %v461 = vld [vmem:[%s455 + $0x28] sm:$0xff]
        %v462 = vld [vmem:[%s455 + $0x30] sm:$0xff]
        %v463 = vld [vmem:[%s455 + $0x38] sm:$0xff]
        %v464 = vld [vmem:[%s455 + $0x40] sm:$0xff]
        %v465 = vld [vmem:[%s455 + $0x48] sm:$0xff]
        %v466 = vld [vmem:[%s455 + $0x50] sm:$0xff]
        %v467 = vld [vmem:[%s455 + $0x58] sm:$0xff]
        %v468 = vld [vmem:[%s455 + $0x60] sm:$0xff]
        %v469 = vld [vmem:[%s455 + $0x68] sm:$0xff]
        %v470 = vld [vmem:[%s455 + $0x70] sm:$0xff]
        %v471 = vld [vmem:[%s455 + $0x78] sm:$0xff]
        %v472 = vld [vmem:[%s455 + $0x80] sm:$0xff]
        %v473 = vld [vmem:[%s455 + $0x88] sm:$0xff]
        %v474 = vld [vmem:[%s455 + $0x90] sm:$0xff]
        %v475 = vld [vmem:[%s455 + $0x98] sm:$0xff]
        %v476 = vld [vmem:[%s455 + $0xa0] sm:$0xff]
        %v477 = vld [vmem:[%s455 + $0xa8] sm:$0xff]
        %v478 = vld [vmem:[%s455 + $0xb0] sm:$0xff]
        %v479 = vld [vmem:[%s455 + $0xb8] sm:$0xff]
        %v480 = vld [vmem:[%s455 + $0xc0] sm:$0xff]
        %v481 = vld [vmem:[%s455 + $0xc8] sm:$0xff]
        %v482 = vld [vmem:[%s455 + $0xd0] sm:$0xff]
        %v483 = vld [vmem:[%s455 + $0xd8] sm:$0xff]
        %v484 = vld [vmem:[%s455 + $0xe0] sm:$0xff]
        %v485 = vld [vmem:[%s455 + $0xe8] sm:$0xff]
        %v486 = vld [vmem:[%s455 + $0xf0] sm:$0xff]
        %v487 = vld [vmem:[%s455 + $0xf8] sm:$0xff]
        %s488 = scalar_lea.vmem %s240, 1536 [#allocation4]
        %v489 = vld [vmem:[%s488] sm:$0xff]
        %v490 = vld [vmem:[%s488 + $0x8] sm:$0xff]
        %v491 = vld [vmem:[%s488 + $0x10] sm:$0xff]
        %v492 = vld [vmem:[%s488 + $0x18] sm:$0xff]
        %v493 = vld [vmem:[%s488 + $0x20] sm:$0xff]
        %v494 = vld [vmem:[%s488 + $0x28] sm:$0xff]
        %v495 = vld [vmem:[%s488 + $0x30] sm:$0xff]
        %v496 = vld [vmem:[%s488 + $0x38] sm:$0xff]
        %v497 = vld [vmem:[%s488 + $0x40] sm:$0xff]
        %v498 = vld [vmem:[%s488 + $0x48] sm:$0xff]
        %v499 = vld [vmem:[%s488 + $0x50] sm:$0xff]
        %v500 = vld [vmem:[%s488 + $0x58] sm:$0xff]
        %v501 = vld [vmem:[%s488 + $0x60] sm:$0xff]
        %v502 = vld [vmem:[%s488 + $0x68] sm:$0xff]
        %v503 = vld [vmem:[%s488 + $0x70] sm:$0xff]
        %v504 = vld [vmem:[%s488 + $0x78] sm:$0xff]
        %v505 = vld [vmem:[%s488 + $0x80] sm:$0xff]
        %v506 = vld [vmem:[%s488 + $0x88] sm:$0xff]
        %v507 = vld [vmem:[%s488 + $0x90] sm:$0xff]
        %v508 = vld [vmem:[%s488 + $0x98] sm:$0xff]
        %v509 = vld [vmem:[%s488 + $0xa0] sm:$0xff]
        %v510 = vld [vmem:[%s488 + $0xa8] sm:$0xff]
        %v511 = vld [vmem:[%s488 + $0xb0] sm:$0xff]
        %v512 = vld [vmem:[%s488 + $0xb8] sm:$0xff]
        %v513 = vld [vmem:[%s488 + $0xc0] sm:$0xff]
        %v514 = vld [vmem:[%s488 + $0xc8] sm:$0xff]
        %v515 = vld [vmem:[%s488 + $0xd0] sm:$0xff]
        %v516 = vld [vmem:[%s488 + $0xd8] sm:$0xff]
        %v517 = vld [vmem:[%s488 + $0xe0] sm:$0xff]
        %v518 = vld [vmem:[%s488 + $0xe8] sm:$0xff]
        %v519 = vld [vmem:[%s488 + $0xf0] sm:$0xff]
        %v520 = vld [vmem:[%s488 + $0xf8] sm:$0xff]
        %s521 = scalar_lea.vmem %s240, 1792 [#allocation4]
        %v522 = vld [vmem:[%s521] sm:$0xff]
        %v523 = vld [vmem:[%s521 + $0x8] sm:$0xff]
        %v524 = vld [vmem:[%s521 + $0x10] sm:$0xff]
        %v525 = vld [vmem:[%s521 + $0x18] sm:$0xff]
        %v526 = vld [vmem:[%s521 + $0x20] sm:$0xff]
        %v527 = vld [vmem:[%s521 + $0x28] sm:$0xff]
        %v528 = vld [vmem:[%s521 + $0x30] sm:$0xff]
        %v529 = vld [vmem:[%s521 + $0x38] sm:$0xff]
        %v530 = vld [vmem:[%s521 + $0x40] sm:$0xff]
        %v531 = vld [vmem:[%s521 + $0x48] sm:$0xff]
        %v532 = vld [vmem:[%s521 + $0x50] sm:$0xff]
        %v533 = vld [vmem:[%s521 + $0x58] sm:$0xff]
        %v534 = vld [vmem:[%s521 + $0x60] sm:$0xff]
        %v535 = vld [vmem:[%s521 + $0x68] sm:$0xff]
        %v536 = vld [vmem:[%s521 + $0x70] sm:$0xff]
        %v537 = vld [vmem:[%s521 + $0x78] sm:$0xff]
        %v538 = vld [vmem:[%s521 + $0x80] sm:$0xff]
        %v539 = vld [vmem:[%s521 + $0x88] sm:$0xff]
        %v540 = vld [vmem:[%s521 + $0x90] sm:$0xff]
        %v541 = vld [vmem:[%s521 + $0x98] sm:$0xff]
        %v542 = vld [vmem:[%s521 + $0xa0] sm:$0xff]
        %v543 = vld [vmem:[%s521 + $0xa8] sm:$0xff]
        %v544 = vld [vmem:[%s521 + $0xb0] sm:$0xff]
        %v545 = vld [vmem:[%s521 + $0xb8] sm:$0xff]
        %v546 = vld [vmem:[%s521 + $0xc0] sm:$0xff]
        %v547 = vld [vmem:[%s521 + $0xc8] sm:$0xff]
        %v548 = vld [vmem:[%s521 + $0xd0] sm:$0xff]
        %v549 = vld [vmem:[%s521 + $0xd8] sm:$0xff]
        %v550 = vld [vmem:[%s521 + $0xe0] sm:$0xff]
        %v551 = vld [vmem:[%s521 + $0xe8] sm:$0xff]
        %v552 = vld [vmem:[%s521 + $0xf0] sm:$0xff]
        %v553 = vld [vmem:[%s521 + $0xf8] sm:$0xff]
        %v554 = vadd.f32 %v291, %v324
        %v555 = vadd.f32 %v292, %v325
        %v556 = vadd.f32 %v293, %v326
        %v557 = vadd.f32 %v294, %v327
        %v558 = vadd.f32 %v295, %v328
        %v559 = vadd.f32 %v296, %v329
        %v560 = vadd.f32 %v297, %v330
        %v561 = vadd.f32 %v298, %v331
        %v562 = vadd.f32 %v299, %v332
        %v563 = vadd.f32 %v300, %v333
        %v564 = vadd.f32 %v301, %v334
        %v565 = vadd.f32 %v302, %v335
        %v566 = vadd.f32 %v303, %v336
        %v567 = vadd.f32 %v304, %v337
        %v568 = vadd.f32 %v305, %v338
        %v569 = vadd.f32 %v306, %v339
        %v570 = vadd.f32 %v307, %v340
        %v571 = vadd.f32 %v308, %v341
        %v572 = vadd.f32 %v309, %v342
        %v573 = vadd.f32 %v310, %v343
        %v574 = vadd.f32 %v311, %v344
        %v575 = vadd.f32 %v312, %v345
        %v576 = vadd.f32 %v313, %v346
        %v577 = vadd.f32 %v314, %v347
        %v578 = vadd.f32 %v315, %v348
        %v579 = vadd.f32 %v316, %v349
        %v580 = vadd.f32 %v317, %v350
        %v581 = vadd.f32 %v318, %v351
        %v582 = vadd.f32 %v319, %v352
        %v583 = vadd.f32 %v320, %v353
        %v584 = vadd.f32 %v321, %v354
        %v585 = vadd.f32 %v322, %v355
        %v586 = vadd.f32 %v554, %v357
        %v587 = vadd.f32 %v555, %v358
        %v588 = vadd.f32 %v556, %v359
        %v589 = vadd.f32 %v557, %v360
        %v590 = vadd.f32 %v558, %v361
        %v591 = vadd.f32 %v559, %v362
        %v592 = vadd.f32 %v560, %v363
        %v593 = vadd.f32 %v561, %v364
        %v594 = vadd.f32 %v562, %v365
        %v595 = vadd.f32 %v563, %v366
        %v596 = vadd.f32 %v564, %v367
        %v597 = vadd.f32 %v565, %v368
        %v598 = vadd.f32 %v566, %v369
        %v599 = vadd.f32 %v567, %v370
        %v600 = vadd.f32 %v568, %v371
        %v601 = vadd.f32 %v569, %v372
        %v602 = vadd.f32 %v570, %v373
        %v603 = vadd.f32 %v571, %v374
        %v604 = vadd.f32 %v572, %v375
        %v605 = vadd.f32 %v573, %v376
        %v606 = vadd.f32 %v574, %v377
        %v607 = vadd.f32 %v575, %v378
        %v608 = vadd.f32 %v576, %v379
        %v609 = vadd.f32 %v577, %v380
        %v610 = vadd.f32 %v578, %v381
        %v611 = vadd.f32 %v579, %v382
        %v612 = vadd.f32 %v580, %v383
        %v613 = vadd.f32 %v581, %v384
        %v614 = vadd.f32 %v582, %v385
        %v615 = vadd.f32 %v583, %v386
        %v616 = vadd.f32 %v584, %v387
        %v617 = vadd.f32 %v585, %v388
        %v618 = vadd.f32 %v586, %v390
        %v619 = vadd.f32 %v587, %v391
        %v620 = vadd.f32 %v588, %v392
        %v621 = vadd.f32 %v589, %v393
        %v622 = vadd.f32 %v590, %v394
        %v623 = vadd.f32 %v591, %v395
        %v624 = vadd.f32 %v592, %v396
        %v625 = vadd.f32 %v593, %v397
        %v626 = vadd.f32 %v594, %v398
        %v627 = vadd.f32 %v595, %v399
        %v628 = vadd.f32 %v596, %v400
        %v629 = vadd.f32 %v597, %v401
        %v630 = vadd.f32 %v598, %v402
        %v631 = vadd.f32 %v599, %v403
        %v632 = vadd.f32 %v600, %v404
        %v633 = vadd.f32 %v601, %v405
        %v634 = vadd.f32 %v602, %v406
        %v635 = vadd.f32 %v603, %v407
        %v636 = vadd.f32 %v604, %v408
        %v637 = vadd.f32 %v605, %v409
        %v638 = vadd.f32 %v606, %v410
        %v639 = vadd.f32 %v607, %v411
        %v640 = vadd.f32 %v608, %v412
        %v641 = vadd.f32 %v609, %v413
        %v642 = vadd.f32 %v610, %v414
        %v643 = vadd.f32 %v611, %v415
        %v644 = vadd.f32 %v612, %v416
        %v645 = vadd.f32 %v613, %v417
        %v646 = vadd.f32 %v614, %v418
        %v647 = vadd.f32 %v615, %v419
        %v648 = vadd.f32 %v616, %v420
        %v649 = vadd.f32 %v617, %v421
        %v650 = vrcp.pop %v618
        %v651 = vmul.f32 %v618, %v650
        %v652 = vsub.f32 1.0, %v651
        %v653 = vmul.f32 %v650, %v652
        %v654 = vadd.f32 %v650, %v653
        %vm655 = vweird.f32 %v618
        %vm656 = vweird.f32 %v650
        %vm657 = vmor %vm655, %vm656
        %v658 = vsel %vm657, %v650, %v654
        %v659 = vand.u32 2147483647, %v618
        %vm660 = vcmp.eq.f32.partialorder %v659, 8.507059e+37
        %v661 = vand.u32 %v618, 2147483648
        %v662 = vor.u32 1.1754944e-38, %v661
        %v663 = vsel %vm660, %v662, %v658
        %v664 = vmul.f32 1.0, %v663
        %v665 = vrcp.pop %v619
        %v666 = vmul.f32 %v619, %v665
        %v667 = vsub.f32 1.0, %v666
        %v668 = vmul.f32 %v665, %v667
        %v669 = vadd.f32 %v665, %v668
        %vm670 = vweird.f32 %v619
        %vm671 = vweird.f32 %v665
        %vm672 = vmor %vm670, %vm671
        %v673 = vsel %vm672, %v665, %v669
        %v674 = vand.u32 2147483647, %v619
        %vm675 = vcmp.eq.f32.partialorder %v674, 8.507059e+37
        %v676 = vand.u32 %v619, 2147483648
        %v677 = vor.u32 1.1754944e-38, %v676
        %v678 = vsel %vm675, %v677, %v673
        %v679 = vmul.f32 1.0, %v678
        %v680 = vrcp.pop %v620
        %v681 = vmul.f32 %v620, %v680
        %v682 = vsub.f32 1.0, %v681
        %v683 = vmul.f32 %v680, %v682
        %v684 = vadd.f32 %v680, %v683
        %vm685 = vweird.f32 %v620
        %vm686 = vweird.f32 %v680
        %vm687 = vmor %vm685, %vm686
        %v688 = vsel %vm687, %v680, %v684
        %v689 = vand.u32 2147483647, %v620
        %vm690 = vcmp.eq.f32.partialorder %v689, 8.507059e+37
        %v691 = vand.u32 %v620, 2147483648
        %v692 = vor.u32 1.1754944e-38, %v691
        %v693 = vsel %vm690, %v692, %v688
        %v694 = vmul.f32 1.0, %v693
        %v695 = vrcp.pop %v621
        %v696 = vmul.f32 %v621, %v695
        %v697 = vsub.f32 1.0, %v696
        %v698 = vmul.f32 %v695, %v697
        %v699 = vadd.f32 %v695, %v698
        %vm700 = vweird.f32 %v621
        %vm701 = vweird.f32 %v695
        %vm702 = vmor %vm700, %vm701
        %v703 = vsel %vm702, %v695, %v699
        %v704 = vand.u32 2147483647, %v621
        %vm705 = vcmp.eq.f32.partialorder %v704, 8.507059e+37
        %v706 = vand.u32 %v621, 2147483648
        %v707 = vor.u32 1.1754944e-38, %v706
        %v708 = vsel %vm705, %v707, %v703
        %v709 = vmul.f32 1.0, %v708
        %v710 = vrcp.pop %v622
        %v711 = vmul.f32 %v622, %v710
        %v712 = vsub.f32 1.0, %v711
        %v713 = vmul.f32 %v710, %v712
        %v714 = vadd.f32 %v710, %v713
        %vm715 = vweird.f32 %v622
        %vm716 = vweird.f32 %v710
        %vm717 = vmor %vm715, %vm716
        %v718 = vsel %vm717, %v710, %v714
        %v719 = vand.u32 2147483647, %v622
        %vm720 = vcmp.eq.f32.partialorder %v719, 8.507059e+37
        %v721 = vand.u32 %v622, 2147483648
        %v722 = vor.u32 1.1754944e-38, %v721
        %v723 = vsel %vm720, %v722, %v718
        %v724 = vmul.f32 1.0, %v723
        %v725 = vrcp.pop %v623
        %v726 = vmul.f32 %v623, %v725
        %v727 = vsub.f32 1.0, %v726
        %v728 = vmul.f32 %v725, %v727
        %v729 = vadd.f32 %v725, %v728
        %vm730 = vweird.f32 %v623
        %vm731 = vweird.f32 %v725
        %vm732 = vmor %vm730, %vm731
        %v733 = vsel %vm732, %v725, %v729
        %v734 = vand.u32 2147483647, %v623
        %vm735 = vcmp.eq.f32.partialorder %v734, 8.507059e+37
        %v736 = vand.u32 %v623, 2147483648
        %v737 = vor.u32 1.1754944e-38, %v736
        %v738 = vsel %vm735, %v737, %v733
        %v739 = vmul.f32 1.0, %v738
        %v740 = vrcp.pop %v624
        %v741 = vmul.f32 %v624, %v740
        %v742 = vsub.f32 1.0, %v741
        %v743 = vmul.f32 %v740, %v742
        %v744 = vadd.f32 %v740, %v743
        %vm745 = vweird.f32 %v624
        %vm746 = vweird.f32 %v740
        %vm747 = vmor %vm745, %vm746
        %v748 = vsel %vm747, %v740, %v744
        %v749 = vand.u32 2147483647, %v624
        %vm750 = vcmp.eq.f32.partialorder %v749, 8.507059e+37
        %v751 = vand.u32 %v624, 2147483648
        %v752 = vor.u32 1.1754944e-38, %v751
        %v753 = vsel %vm750, %v752, %v748
        %v754 = vmul.f32 1.0, %v753
        %v755 = vrcp.pop %v625
        %v756 = vmul.f32 %v625, %v755
        %v757 = vsub.f32 1.0, %v756
        %v758 = vmul.f32 %v755, %v757
        %v759 = vadd.f32 %v755, %v758
        %vm760 = vweird.f32 %v625
        %vm761 = vweird.f32 %v755
        %vm762 = vmor %vm760, %vm761
        %v763 = vsel %vm762, %v755, %v759
        %v764 = vand.u32 2147483647, %v625
        %vm765 = vcmp.eq.f32.partialorder %v764, 8.507059e+37
        %v766 = vand.u32 %v625, 2147483648
        %v767 = vor.u32 1.1754944e-38, %v766
        %v768 = vsel %vm765, %v767, %v763
        %v769 = vmul.f32 1.0, %v768
        %v770 = vrcp.pop %v626
        %v771 = vmul.f32 %v626, %v770
        %v772 = vsub.f32 1.0, %v771
        %v773 = vmul.f32 %v770, %v772
        %v774 = vadd.f32 %v770, %v773
        %vm775 = vweird.f32 %v626
        %vm776 = vweird.f32 %v770
        %vm777 = vmor %vm775, %vm776
        %v778 = vsel %vm777, %v770, %v774
        %v779 = vand.u32 2147483647, %v626
        %vm780 = vcmp.eq.f32.partialorder %v779, 8.507059e+37
        %v781 = vand.u32 %v626, 2147483648
        %v782 = vor.u32 1.1754944e-38, %v781
        %v783 = vsel %vm780, %v782, %v778
        %v784 = vmul.f32 1.0, %v783
        %v785 = vrcp.pop %v627
        %v786 = vmul.f32 %v627, %v785
        %v787 = vsub.f32 1.0, %v786
        %v788 = vmul.f32 %v785, %v787
        %v789 = vadd.f32 %v785, %v788
        %vm790 = vweird.f32 %v627
        %vm791 = vweird.f32 %v785
        %vm792 = vmor %vm790, %vm791
        %v793 = vsel %vm792, %v785, %v789
        %v794 = vand.u32 2147483647, %v627
        %vm795 = vcmp.eq.f32.partialorder %v794, 8.507059e+37
        %v796 = vand.u32 %v627, 2147483648
        %v797 = vor.u32 1.1754944e-38, %v796
        %v798 = vsel %vm795, %v797, %v793
        %v799 = vmul.f32 1.0, %v798
        %v800 = vrcp.pop %v628
        %v801 = vmul.f32 %v628, %v800
        %v802 = vsub.f32 1.0, %v801
        %v803 = vmul.f32 %v800, %v802
        %v804 = vadd.f32 %v800, %v803
        %vm805 = vweird.f32 %v628
        %vm806 = vweird.f32 %v800
        %vm807 = vmor %vm805, %vm806
        %v808 = vsel %vm807, %v800, %v804
        %v809 = vand.u32 2147483647, %v628
        %vm810 = vcmp.eq.f32.partialorder %v809, 8.507059e+37
        %v811 = vand.u32 %v628, 2147483648
        %v812 = vor.u32 1.1754944e-38, %v811
        %v813 = vsel %vm810, %v812, %v808
        %v814 = vmul.f32 1.0, %v813
        %v815 = vrcp.pop %v629
        %v816 = vmul.f32 %v629, %v815
        %v817 = vsub.f32 1.0, %v816
        %v818 = vmul.f32 %v815, %v817
        %v819 = vadd.f32 %v815, %v818
        %vm820 = vweird.f32 %v629
        %vm821 = vweird.f32 %v815
        %vm822 = vmor %vm820, %vm821
        %v823 = vsel %vm822, %v815, %v819
        %v824 = vand.u32 2147483647, %v629
        %vm825 = vcmp.eq.f32.partialorder %v824, 8.507059e+37
        %v826 = vand.u32 %v629, 2147483648
        %v827 = vor.u32 1.1754944e-38, %v826
        %v828 = vsel %vm825, %v827, %v823
        %v829 = vmul.f32 1.0, %v828
        %v830 = vrcp.pop %v630
        %v831 = vmul.f32 %v630, %v830
        %v832 = vsub.f32 1.0, %v831
        %v833 = vmul.f32 %v830, %v832
        %v834 = vadd.f32 %v830, %v833
        %vm835 = vweird.f32 %v630
        %vm836 = vweird.f32 %v830
        %vm837 = vmor %vm835, %vm836
        %v838 = vsel %vm837, %v830, %v834
        %v839 = vand.u32 2147483647, %v630
        %vm840 = vcmp.eq.f32.partialorder %v839, 8.507059e+37
        %v841 = vand.u32 %v630, 2147483648
        %v842 = vor.u32 1.1754944e-38, %v841
        %v843 = vsel %vm840, %v842, %v838
        %v844 = vmul.f32 1.0, %v843
        %v845 = vrcp.pop %v631
        %v846 = vmul.f32 %v631, %v845
        %v847 = vsub.f32 1.0, %v846
        %v848 = vmul.f32 %v845, %v847
        %v849 = vadd.f32 %v845, %v848
        %vm850 = vweird.f32 %v631
        %vm851 = vweird.f32 %v845
        %vm852 = vmor %vm850, %vm851
        %v853 = vsel %vm852, %v845, %v849
        %v854 = vand.u32 2147483647, %v631
        %vm855 = vcmp.eq.f32.partialorder %v854, 8.507059e+37
        %v856 = vand.u32 %v631, 2147483648
        %v857 = vor.u32 1.1754944e-38, %v856
        %v858 = vsel %vm855, %v857, %v853
        %v859 = vmul.f32 1.0, %v858
        %v860 = vrcp.pop %v632
        %v861 = vmul.f32 %v632, %v860
        %v862 = vsub.f32 1.0, %v861
        %v863 = vmul.f32 %v860, %v862
        %v864 = vadd.f32 %v860, %v863
        %vm865 = vweird.f32 %v632
        %vm866 = vweird.f32 %v860
        %vm867 = vmor %vm865, %vm866
        %v868 = vsel %vm867, %v860, %v864
        %v869 = vand.u32 2147483647, %v632
        %vm870 = vcmp.eq.f32.partialorder %v869, 8.507059e+37
        %v871 = vand.u32 %v632, 2147483648
        %v872 = vor.u32 1.1754944e-38, %v871
        %v873 = vsel %vm870, %v872, %v868
        %v874 = vmul.f32 1.0, %v873
        %v875 = vrcp.pop %v633
        %v876 = vmul.f32 %v633, %v875
        %v877 = vsub.f32 1.0, %v876
        %v878 = vmul.f32 %v875, %v877
        %v879 = vadd.f32 %v875, %v878
        %vm880 = vweird.f32 %v633
        %vm881 = vweird.f32 %v875
        %vm882 = vmor %vm880, %vm881
        %v883 = vsel %vm882, %v875, %v879
        %v884 = vand.u32 2147483647, %v633
        %vm885 = vcmp.eq.f32.partialorder %v884, 8.507059e+37
        %v886 = vand.u32 %v633, 2147483648
        %v887 = vor.u32 1.1754944e-38, %v886
        %v888 = vsel %vm885, %v887, %v883
        %v889 = vmul.f32 1.0, %v888
        %v890 = vrcp.pop %v634
        %v891 = vmul.f32 %v634, %v890
        %v892 = vsub.f32 1.0, %v891
        %v893 = vmul.f32 %v890, %v892
        %v894 = vadd.f32 %v890, %v893
        %vm895 = vweird.f32 %v634
        %vm896 = vweird.f32 %v890
        %vm897 = vmor %vm895, %vm896
        %v898 = vsel %vm897, %v890, %v894
        %v899 = vand.u32 2147483647, %v634
        %vm900 = vcmp.eq.f32.partialorder %v899, 8.507059e+37
        %v901 = vand.u32 %v634, 2147483648
        %v902 = vor.u32 1.1754944e-38, %v901
        %v903 = vsel %vm900, %v902, %v898
        %v904 = vmul.f32 1.0, %v903
        %v905 = vrcp.pop %v635
        %v906 = vmul.f32 %v635, %v905
        %v907 = vsub.f32 1.0, %v906
        %v908 = vmul.f32 %v905, %v907
        %v909 = vadd.f32 %v905, %v908
        %vm910 = vweird.f32 %v635
        %vm911 = vweird.f32 %v905
        %vm912 = vmor %vm910, %vm911
        %v913 = vsel %vm912, %v905, %v909
        %v914 = vand.u32 2147483647, %v635
        %vm915 = vcmp.eq.f32.partialorder %v914, 8.507059e+37
        %v916 = vand.u32 %v635, 2147483648
        %v917 = vor.u32 1.1754944e-38, %v916
        %v918 = vsel %vm915, %v917, %v913
        %v919 = vmul.f32 1.0, %v918
        %v920 = vrcp.pop %v636
        %v921 = vmul.f32 %v636, %v920
        %v922 = vsub.f32 1.0, %v921
        %v923 = vmul.f32 %v920, %v922
        %v924 = vadd.f32 %v920, %v923
        %vm925 = vweird.f32 %v636
        %vm926 = vweird.f32 %v920
        %vm927 = vmor %vm925, %vm926
        %v928 = vsel %vm927, %v920, %v924
        %v929 = vand.u32 2147483647, %v636
        %vm930 = vcmp.eq.f32.partialorder %v929, 8.507059e+37
        %v931 = vand.u32 %v636, 2147483648
        %v932 = vor.u32 1.1754944e-38, %v931
        %v933 = vsel %vm930, %v932, %v928
        %v934 = vmul.f32 1.0, %v933
        %v935 = vrcp.pop %v637
        %v936 = vmul.f32 %v637, %v935
        %v937 = vsub.f32 1.0, %v936
        %v938 = vmul.f32 %v935, %v937
        %v939 = vadd.f32 %v935, %v938
        %vm940 = vweird.f32 %v637
        %vm941 = vweird.f32 %v935
        %vm942 = vmor %vm940, %vm941
        %v943 = vsel %vm942, %v935, %v939
        %v944 = vand.u32 2147483647, %v637
        %vm945 = vcmp.eq.f32.partialorder %v944, 8.507059e+37
        %v946 = vand.u32 %v637, 2147483648
        %v947 = vor.u32 1.1754944e-38, %v946
        %v948 = vsel %vm945, %v947, %v943
        %v949 = vmul.f32 1.0, %v948
        %v950 = vrcp.pop %v638
        %v951 = vmul.f32 %v638, %v950
        %v952 = vsub.f32 1.0, %v951
        %v953 = vmul.f32 %v950, %v952
        %v954 = vadd.f32 %v950, %v953
        %vm955 = vweird.f32 %v638
        %vm956 = vweird.f32 %v950
        %vm957 = vmor %vm955, %vm956
        %v958 = vsel %vm957, %v950, %v954
        %v959 = vand.u32 2147483647, %v638
        %vm960 = vcmp.eq.f32.partialorder %v959, 8.507059e+37
        %v961 = vand.u32 %v638, 2147483648
        %v962 = vor.u32 1.1754944e-38, %v961
        %v963 = vsel %vm960, %v962, %v958
        %v964 = vmul.f32 1.0, %v963
        %v965 = vrcp.pop %v639
        %v966 = vmul.f32 %v639, %v965
        %v967 = vsub.f32 1.0, %v966
        %v968 = vmul.f32 %v965, %v967
        %v969 = vadd.f32 %v965, %v968
        %vm970 = vweird.f32 %v639
        %vm971 = vweird.f32 %v965
        %vm972 = vmor %vm970, %vm971
        %v973 = vsel %vm972, %v965, %v969
        %v974 = vand.u32 2147483647, %v639
        %vm975 = vcmp.eq.f32.partialorder %v974, 8.507059e+37
        %v976 = vand.u32 %v639, 2147483648
        %v977 = vor.u32 1.1754944e-38, %v976
        %v978 = vsel %vm975, %v977, %v973
        %v979 = vmul.f32 1.0, %v978
        %v980 = vrcp.pop %v640
        %v981 = vmul.f32 %v640, %v980
        %v982 = vsub.f32 1.0, %v981
        %v983 = vmul.f32 %v980, %v982
        %v984 = vadd.f32 %v980, %v983
        %vm985 = vweird.f32 %v640
        %vm986 = vweird.f32 %v980
        %vm987 = vmor %vm985, %vm986
        %v988 = vsel %vm987, %v980, %v984
        %v989 = vand.u32 2147483647, %v640
        %vm990 = vcmp.eq.f32.partialorder %v989, 8.507059e+37
        %v991 = vand.u32 %v640, 2147483648
        %v992 = vor.u32 1.1754944e-38, %v991
        %v993 = vsel %vm990, %v992, %v988
        %v994 = vmul.f32 1.0, %v993
        %v995 = vrcp.pop %v641
        %v996 = vmul.f32 %v641, %v995
        %v997 = vsub.f32 1.0, %v996
        %v998 = vmul.f32 %v995, %v997
        %v999 = vadd.f32 %v995, %v998
        %vm1000 = vweird.f32 %v641
        %vm1001 = vweird.f32 %v995
        %vm1002 = vmor %vm1000, %vm1001
        %v1003 = vsel %vm1002, %v995, %v999
        %v1004 = vand.u32 2147483647, %v641
        %vm1005 = vcmp.eq.f32.partialorder %v1004, 8.507059e+37
        %v1006 = vand.u32 %v641, 2147483648
        %v1007 = vor.u32 1.1754944e-38, %v1006
        %v1008 = vsel %vm1005, %v1007, %v1003
        %v1009 = vmul.f32 1.0, %v1008
        %v1010 = vrcp.pop %v642
        %v1011 = vmul.f32 %v642, %v1010
        %v1012 = vsub.f32 1.0, %v1011
        %v1013 = vmul.f32 %v1010, %v1012
        %v1014 = vadd.f32 %v1010, %v1013
        %vm1015 = vweird.f32 %v642
        %vm1016 = vweird.f32 %v1010
        %vm1017 = vmor %vm1015, %vm1016
        %v1018 = vsel %vm1017, %v1010, %v1014
        %v1019 = vand.u32 2147483647, %v642
        %vm1020 = vcmp.eq.f32.partialorder %v1019, 8.507059e+37
        %v1021 = vand.u32 %v642, 2147483648
        %v1022 = vor.u32 1.1754944e-38, %v1021
        %v1023 = vsel %vm1020, %v1022, %v1018
        %v1024 = vmul.f32 1.0, %v1023
        %v1025 = vrcp.pop %v643
        %v1026 = vmul.f32 %v643, %v1025
        %v1027 = vsub.f32 1.0, %v1026
        %v1028 = vmul.f32 %v1025, %v1027
        %v1029 = vadd.f32 %v1025, %v1028
        %vm1030 = vweird.f32 %v643
        %vm1031 = vweird.f32 %v1025
        %vm1032 = vmor %vm1030, %vm1031
        %v1033 = vsel %vm1032, %v1025, %v1029
        %v1034 = vand.u32 2147483647, %v643
        %vm1035 = vcmp.eq.f32.partialorder %v1034, 8.507059e+37
        %v1036 = vand.u32 %v643, 2147483648
        %v1037 = vor.u32 1.1754944e-38, %v1036
        %v1038 = vsel %vm1035, %v1037, %v1033
        %v1039 = vmul.f32 1.0, %v1038
        %v1040 = vrcp.pop %v644
        %v1041 = vmul.f32 %v644, %v1040
        %v1042 = vsub.f32 1.0, %v1041
        %v1043 = vmul.f32 %v1040, %v1042
        %v1044 = vadd.f32 %v1040, %v1043
        %vm1045 = vweird.f32 %v644
        %vm1046 = vweird.f32 %v1040
        %vm1047 = vmor %vm1045, %vm1046
        %v1048 = vsel %vm1047, %v1040, %v1044
        %v1049 = vand.u32 2147483647, %v644
        %vm1050 = vcmp.eq.f32.partialorder %v1049, 8.507059e+37
        %v1051 = vand.u32 %v644, 2147483648
        %v1052 = vor.u32 1.1754944e-38, %v1051
        %v1053 = vsel %vm1050, %v1052, %v1048
        %v1054 = vmul.f32 1.0, %v1053
        %v1055 = vrcp.pop %v645
        %v1056 = vmul.f32 %v645, %v1055
        %v1057 = vsub.f32 1.0, %v1056
        %v1058 = vmul.f32 %v1055, %v1057
        %v1059 = vadd.f32 %v1055, %v1058
        %vm1060 = vweird.f32 %v645
        %vm1061 = vweird.f32 %v1055
        %vm1062 = vmor %vm1060, %vm1061
        %v1063 = vsel %vm1062, %v1055, %v1059
        %v1064 = vand.u32 2147483647, %v645
        %vm1065 = vcmp.eq.f32.partialorder %v1064, 8.507059e+37
        %v1066 = vand.u32 %v645, 2147483648
        %v1067 = vor.u32 1.1754944e-38, %v1066
        %v1068 = vsel %vm1065, %v1067, %v1063
        %v1069 = vmul.f32 1.0, %v1068
        %v1070 = vrcp.pop %v646
        %v1071 = vmul.f32 %v646, %v1070
        %v1072 = vsub.f32 1.0, %v1071
        %v1073 = vmul.f32 %v1070, %v1072
        %v1074 = vadd.f32 %v1070, %v1073
        %vm1075 = vweird.f32 %v646
        %vm1076 = vweird.f32 %v1070
        %vm1077 = vmor %vm1075, %vm1076
        %v1078 = vsel %vm1077, %v1070, %v1074
        %v1079 = vand.u32 2147483647, %v646
        %vm1080 = vcmp.eq.f32.partialorder %v1079, 8.507059e+37
        %v1081 = vand.u32 %v646, 2147483648
        %v1082 = vor.u32 1.1754944e-38, %v1081
        %v1083 = vsel %vm1080, %v1082, %v1078
        %v1084 = vmul.f32 1.0, %v1083
        %v1085 = vrcp.pop %v647
        %v1086 = vmul.f32 %v647, %v1085
        %v1087 = vsub.f32 1.0, %v1086
        %v1088 = vmul.f32 %v1085, %v1087
        %v1089 = vadd.f32 %v1085, %v1088
        %vm1090 = vweird.f32 %v647
        %vm1091 = vweird.f32 %v1085
        %vm1092 = vmor %vm1090, %vm1091
        %v1093 = vsel %vm1092, %v1085, %v1089
        %v1094 = vand.u32 2147483647, %v647
        %vm1095 = vcmp.eq.f32.partialorder %v1094, 8.507059e+37
        %v1096 = vand.u32 %v647, 2147483648
        %v1097 = vor.u32 1.1754944e-38, %v1096
        %v1098 = vsel %vm1095, %v1097, %v1093
        %v1099 = vmul.f32 1.0, %v1098
        %v1100 = vrcp.pop %v648
        %v1101 = vmul.f32 %v648, %v1100
        %v1102 = vsub.f32 1.0, %v1101
        %v1103 = vmul.f32 %v1100, %v1102
        %v1104 = vadd.f32 %v1100, %v1103
        %vm1105 = vweird.f32 %v648
        %vm1106 = vweird.f32 %v1100
        %vm1107 = vmor %vm1105, %vm1106
        %v1108 = vsel %vm1107, %v1100, %v1104
        %v1109 = vand.u32 2147483647, %v648
        %vm1110 = vcmp.eq.f32.partialorder %v1109, 8.507059e+37
        %v1111 = vand.u32 %v648, 2147483648
        %v1112 = vor.u32 1.1754944e-38, %v1111
        %v1113 = vsel %vm1110, %v1112, %v1108
        %v1114 = vmul.f32 1.0, %v1113
        %v1115 = vrcp.pop %v649
        %v1116 = vmul.f32 %v649, %v1115
        %v1117 = vsub.f32 1.0, %v1116
        %v1118 = vmul.f32 %v1115, %v1117
        %v1119 = vadd.f32 %v1115, %v1118
        %vm1120 = vweird.f32 %v649
        %vm1121 = vweird.f32 %v1115
        %vm1122 = vmor %vm1120, %vm1121
        %v1123 = vsel %vm1122, %v1115, %v1119
        %v1124 = vand.u32 2147483647, %v649
        %vm1125 = vcmp.eq.f32.partialorder %v1124, 8.507059e+37
        %v1126 = vand.u32 %v649, 2147483648
        %v1127 = vor.u32 1.1754944e-38, %v1126
        %v1128 = vsel %vm1125, %v1127, %v1123
        %v1129 = vmul.f32 1.0, %v1128
        %v1130 = vstv %s286
        %v1131 = vmul.f32 %v1130, %v489
        %v1132 = vmul.f32 %v1130, %v490
        %v1133 = vmul.f32 %v1130, %v491
        %v1134 = vmul.f32 %v1130, %v492
        %v1135 = vmul.f32 %v1130, %v493
        %v1136 = vmul.f32 %v1130, %v494
        %v1137 = vmul.f32 %v1130, %v495
        %v1138 = vmul.f32 %v1130, %v496
        %v1139 = vmul.f32 %v1130, %v497
        %v1140 = vmul.f32 %v1130, %v498
        %v1141 = vmul.f32 %v1130, %v499
        %v1142 = vmul.f32 %v1130, %v500
        %v1143 = vmul.f32 %v1130, %v501
        %v1144 = vmul.f32 %v1130, %v502
        %v1145 = vmul.f32 %v1130, %v503
        %v1146 = vmul.f32 %v1130, %v504
        %v1147 = vmul.f32 %v1130, %v505
        %v1148 = vmul.f32 %v1130, %v506
        %v1149 = vmul.f32 %v1130, %v507
        %v1150 = vmul.f32 %v1130, %v508
        %v1151 = vmul.f32 %v1130, %v509
        %v1152 = vmul.f32 %v1130, %v510
        %v1153 = vmul.f32 %v1130, %v511
        %v1154 = vmul.f32 %v1130, %v512
        %v1155 = vmul.f32 %v1130, %v513
        %v1156 = vmul.f32 %v1130, %v514
        %v1157 = vmul.f32 %v1130, %v515
        %v1158 = vmul.f32 %v1130, %v516
        %v1159 = vmul.f32 %v1130, %v517
        %v1160 = vmul.f32 %v1130, %v518
        %v1161 = vmul.f32 %v1130, %v519
        %v1162 = vmul.f32 %v1130, %v520
        %v1163 = vmul.f32 %v1131, %v664
        %v1164 = vmul.f32 %v1132, %v679
        %v1165 = vmul.f32 %v1133, %v694
        %v1166 = vmul.f32 %v1134, %v709
        %v1167 = vmul.f32 %v1135, %v724
        %v1168 = vmul.f32 %v1136, %v739
        %v1169 = vmul.f32 %v1137, %v754
        %v1170 = vmul.f32 %v1138, %v769
        %v1171 = vmul.f32 %v1139, %v784
        %v1172 = vmul.f32 %v1140, %v799
        %v1173 = vmul.f32 %v1141, %v814
        %v1174 = vmul.f32 %v1142, %v829
        %v1175 = vmul.f32 %v1143, %v844
        %v1176 = vmul.f32 %v1144, %v859
        %v1177 = vmul.f32 %v1145, %v874
        %v1178 = vmul.f32 %v1146, %v889
        %v1179 = vmul.f32 %v1147, %v904
        %v1180 = vmul.f32 %v1148, %v919
        %v1181 = vmul.f32 %v1149, %v934
        %v1182 = vmul.f32 %v1150, %v949
        %v1183 = vmul.f32 %v1151, %v964
        %v1184 = vmul.f32 %v1152, %v979
        %v1185 = vmul.f32 %v1153, %v994
        %v1186 = vmul.f32 %v1154, %v1009
        %v1187 = vmul.f32 %v1155, %v1024
        %v1188 = vmul.f32 %v1156, %v1039
        %v1189 = vmul.f32 %v1157, %v1054
        %v1190 = vmul.f32 %v1158, %v1069
        %v1191 = vmul.f32 %v1159, %v1084
        %v1192 = vmul.f32 %v1160, %v1099
        %v1193 = vmul.f32 %v1161, %v1114
        %v1194 = vmul.f32 %v1162, %v1129
        %v1195 = vstv %s289
        %v1196 = vmul.f32 %v1195, %v324
        %v1197 = vmul.f32 %v1195, %v325
        %v1198 = vmul.f32 %v1195, %v326
        %v1199 = vmul.f32 %v1195, %v327
        %v1200 = vmul.f32 %v1195, %v328
        %v1201 = vmul.f32 %v1195, %v329
        %v1202 = vmul.f32 %v1195, %v330
        %v1203 = vmul.f32 %v1195, %v331
        %v1204 = vmul.f32 %v1195, %v332
        %v1205 = vmul.f32 %v1195, %v333
        %v1206 = vmul.f32 %v1195, %v334
        %v1207 = vmul.f32 %v1195, %v335
        %v1208 = vmul.f32 %v1195, %v336
        %v1209 = vmul.f32 %v1195, %v337
        %v1210 = vmul.f32 %v1195, %v338
        %v1211 = vmul.f32 %v1195, %v339
        %v1212 = vmul.f32 %v1195, %v340
        %v1213 = vmul.f32 %v1195, %v341
        %v1214 = vmul.f32 %v1195, %v342
        %v1215 = vmul.f32 %v1195, %v343
        %v1216 = vmul.f32 %v1195, %v344
        %v1217 = vmul.f32 %v1195, %v345
        %v1218 = vmul.f32 %v1195, %v346
        %v1219 = vmul.f32 %v1195, %v347
        %v1220 = vmul.f32 %v1195, %v348
        %v1221 = vmul.f32 %v1195, %v349
        %v1222 = vmul.f32 %v1195, %v350
        %v1223 = vmul.f32 %v1195, %v351
        %v1224 = vmul.f32 %v1195, %v352
        %v1225 = vmul.f32 %v1195, %v353
        %v1226 = vmul.f32 %v1195, %v354
        %v1227 = vmul.f32 %v1195, %v355
        %v1228 = vmul.f32 %v1130, %v357
        %v1229 = vmul.f32 %v1130, %v358
        %v1230 = vmul.f32 %v1130, %v359
        %v1231 = vmul.f32 %v1130, %v360
        %v1232 = vmul.f32 %v1130, %v361
        %v1233 = vmul.f32 %v1130, %v362
        %v1234 = vmul.f32 %v1130, %v363
        %v1235 = vmul.f32 %v1130, %v364
        %v1236 = vmul.f32 %v1130, %v365
        %v1237 = vmul.f32 %v1130, %v366
        %v1238 = vmul.f32 %v1130, %v367
        %v1239 = vmul.f32 %v1130, %v368
        %v1240 = vmul.f32 %v1130, %v369
        %v1241 = vmul.f32 %v1130, %v370
        %v1242 = vmul.f32 %v1130, %v371
        %v1243 = vmul.f32 %v1130, %v372
        %v1244 = vmul.f32 %v1130, %v373
        %v1245 = vmul.f32 %v1130, %v374
        %v1246 = vmul.f32 %v1130, %v375
        %v1247 = vmul.f32 %v1130, %v376
        %v1248 = vmul.f32 %v1130, %v377
        %v1249 = vmul.f32 %v1130, %v378
        %v1250 = vmul.f32 %v1130, %v379
        %v1251 = vmul.f32 %v1130, %v380
        %v1252 = vmul.f32 %v1130, %v381
        %v1253 = vmul.f32 %v1130, %v382
        %v1254 = vmul.f32 %v1130, %v383
        %v1255 = vmul.f32 %v1130, %v384
        %v1256 = vmul.f32 %v1130, %v385
        %v1257 = vmul.f32 %v1130, %v386
        %v1258 = vmul.f32 %v1130, %v387
        %v1259 = vmul.f32 %v1130, %v388
        %v1260 = vmul.f32 %v1228, %v291
        %v1261 = vmul.f32 %v1229, %v292
        %v1262 = vmul.f32 %v1230, %v293
        %v1263 = vmul.f32 %v1231, %v294
        %v1264 = vmul.f32 %v1232, %v295
        %v1265 = vmul.f32 %v1233, %v296
        %v1266 = vmul.f32 %v1234, %v297
        %v1267 = vmul.f32 %v1235, %v298
        %v1268 = vmul.f32 %v1236, %v299
        %v1269 = vmul.f32 %v1237, %v300
        %v1270 = vmul.f32 %v1238, %v301
        %v1271 = vmul.f32 %v1239, %v302
        %v1272 = vmul.f32 %v1240, %v303
        %v1273 = vmul.f32 %v1241, %v304
        %v1274 = vmul.f32 %v1242, %v305
        %v1275 = vmul.f32 %v1243, %v306
        %v1276 = vmul.f32 %v1244, %v307
        %v1277 = vmul.f32 %v1245, %v308
        %v1278 = vmul.f32 %v1246, %v309
        %v1279 = vmul.f32 %v1247, %v310
        %v1280 = vmul.f32 %v1248, %v311
        %v1281 = vmul.f32 %v1249, %v312
        %v1282 = vmul.f32 %v1250, %v313
        %v1283 = vmul.f32 %v1251, %v314
        %v1284 = vmul.f32 %v1252, %v315
        %v1285 = vmul.f32 %v1253, %v316
        %v1286 = vmul.f32 %v1254, %v317
        %v1287 = vmul.f32 %v1255, %v318
        %v1288 = vmul.f32 %v1256, %v319
        %v1289 = vmul.f32 %v1257, %v320
        %v1290 = vmul.f32 %v1258, %v321
        %v1291 = vmul.f32 %v1259, %v322
        %v1292 = vmul.f32 %v1260, %v664
        %v1293 = vmul.f32 %v1261, %v679
        %v1294 = vmul.f32 %v1262, %v694
        %v1295 = vmul.f32 %v1263, %v709
        %v1296 = vmul.f32 %v1264, %v724
        %v1297 = vmul.f32 %v1265, %v739
        %v1298 = vmul.f32 %v1266, %v754
        %v1299 = vmul.f32 %v1267, %v769
        %v1300 = vmul.f32 %v1268, %v784
        %v1301 = vmul.f32 %v1269, %v799
        %v1302 = vmul.f32 %v1270, %v814
        %v1303 = vmul.f32 %v1271, %v829
        %v1304 = vmul.f32 %v1272, %v844
        %v1305 = vmul.f32 %v1273, %v859
        %v1306 = vmul.f32 %v1274, %v874
        %v1307 = vmul.f32 %v1275, %v889
        %v1308 = vmul.f32 %v1276, %v904
        %v1309 = vmul.f32 %v1277, %v919
        %v1310 = vmul.f32 %v1278, %v934
        %v1311 = vmul.f32 %v1279, %v949
        %v1312 = vmul.f32 %v1280, %v964
        %v1313 = vmul.f32 %v1281, %v979
        %v1314 = vmul.f32 %v1282, %v994
        %v1315 = vmul.f32 %v1283, %v1009
        %v1316 = vmul.f32 %v1284, %v1024
        %v1317 = vmul.f32 %v1285, %v1039
        %v1318 = vmul.f32 %v1286, %v1054
        %v1319 = vmul.f32 %v1287, %v1069
        %v1320 = vmul.f32 %v1288, %v1084
        %v1321 = vmul.f32 %v1289, %v1099
        %v1322 = vmul.f32 %v1290, %v1114
        %v1323 = vmul.f32 %v1291, %v1129
        %v1324 = vadd.f32 %v1196, %v1292
        %v1325 = vadd.f32 %v1197, %v1293
        %v1326 = vadd.f32 %v1198, %v1294
        %v1327 = vadd.f32 %v1199, %v1295
        %v1328 = vadd.f32 %v1200, %v1296
        %v1329 = vadd.f32 %v1201, %v1297
        %v1330 = vadd.f32 %v1202, %v1298
        %v1331 = vadd.f32 %v1203, %v1299
        %v1332 = vadd.f32 %v1204, %v1300
        %v1333 = vadd.f32 %v1205, %v1301
        %v1334 = vadd.f32 %v1206, %v1302
        %v1335 = vadd.f32 %v1207, %v1303
        %v1336 = vadd.f32 %v1208, %v1304
        %v1337 = vadd.f32 %v1209, %v1305
        %v1338 = vadd.f32 %v1210, %v1306
        %v1339 = vadd.f32 %v1211, %v1307
        %v1340 = vadd.f32 %v1212, %v1308
        %v1341 = vadd.f32 %v1213, %v1309
        %v1342 = vadd.f32 %v1214, %v1310
        %v1343 = vadd.f32 %v1215, %v1311
        %v1344 = vadd.f32 %v1216, %v1312
        %v1345 = vadd.f32 %v1217, %v1313
        %v1346 = vadd.f32 %v1218, %v1314
        %v1347 = vadd.f32 %v1219, %v1315
        %v1348 = vadd.f32 %v1220, %v1316
        %v1349 = vadd.f32 %v1221, %v1317
        %v1350 = vadd.f32 %v1222, %v1318
        %v1351 = vadd.f32 %v1223, %v1319
        %v1352 = vadd.f32 %v1224, %v1320
        %v1353 = vadd.f32 %v1225, %v1321
        %v1354 = vadd.f32 %v1226, %v1322
        %v1355 = vadd.f32 %v1227, %v1323
        %v1356 = vsub.f32 1.0, %v1163
        %v1357 = vsub.f32 1.0, %v1164
        %v1358 = vsub.f32 1.0, %v1165
        %v1359 = vsub.f32 1.0, %v1166
        %v1360 = vsub.f32 1.0, %v1167
        %v1361 = vsub.f32 1.0, %v1168
        %v1362 = vsub.f32 1.0, %v1169
        %v1363 = vsub.f32 1.0, %v1170
        %v1364 = vsub.f32 1.0, %v1171
        %v1365 = vsub.f32 1.0, %v1172
        %v1366 = vsub.f32 1.0, %v1173
        %v1367 = vsub.f32 1.0, %v1174
        %v1368 = vsub.f32 1.0, %v1175
        %v1369 = vsub.f32 1.0, %v1176
        %v1370 = vsub.f32 1.0, %v1177
        %v1371 = vsub.f32 1.0, %v1178
        %v1372 = vsub.f32 1.0, %v1179
        %v1373 = vsub.f32 1.0, %v1180
        %v1374 = vsub.f32 1.0, %v1181
        %v1375 = vsub.f32 1.0, %v1182
        %v1376 = vsub.f32 1.0, %v1183
        %v1377 = vsub.f32 1.0, %v1184
        %v1378 = vsub.f32 1.0, %v1185
        %v1379 = vsub.f32 1.0, %v1186
        %v1380 = vsub.f32 1.0, %v1187
        %v1381 = vsub.f32 1.0, %v1188
        %v1382 = vsub.f32 1.0, %v1189
        %v1383 = vsub.f32 1.0, %v1190
        %v1384 = vsub.f32 1.0, %v1191
        %v1385 = vsub.f32 1.0, %v1192
        %v1386 = vsub.f32 1.0, %v1193
        %v1387 = vsub.f32 1.0, %v1194
        %v1388 = vmul.f32 %v1356, %v423
        %v1389 = vmul.f32 %v1357, %v424
        %v1390 = vmul.f32 %v1358, %v425
        %v1391 = vmul.f32 %v1359, %v426
        %v1392 = vmul.f32 %v1360, %v427
        %v1393 = vmul.f32 %v1361, %v428
        %v1394 = vmul.f32 %v1362, %v429
        %v1395 = vmul.f32 %v1363, %v430
        %v1396 = vmul.f32 %v1364, %v431
        %v1397 = vmul.f32 %v1365, %v432
        %v1398 = vmul.f32 %v1366, %v433
        %v1399 = vmul.f32 %v1367, %v434
        %v1400 = vmul.f32 %v1368, %v435
        %v1401 = vmul.f32 %v1369, %v436
        %v1402 = vmul.f32 %v1370, %v437
        %v1403 = vmul.f32 %v1371, %v438
        %v1404 = vmul.f32 %v1372, %v439
        %v1405 = vmul.f32 %v1373, %v440
        %v1406 = vmul.f32 %v1374, %v441
        %v1407 = vmul.f32 %v1375, %v442
        %v1408 = vmul.f32 %v1376, %v443
        %v1409 = vmul.f32 %v1377, %v444
        %v1410 = vmul.f32 %v1378, %v445
        %v1411 = vmul.f32 %v1379, %v446
        %v1412 = vmul.f32 %v1380, %v447
        %v1413 = vmul.f32 %v1381, %v448
        %v1414 = vmul.f32 %v1382, %v449
        %v1415 = vmul.f32 %v1383, %v450
        %v1416 = vmul.f32 %v1384, %v451
        %v1417 = vmul.f32 %v1385, %v452
        %v1418 = vmul.f32 %v1386, %v453
        %v1419 = vmul.f32 %v1387, %v454
        %1420 = vst [vmem:[%s259] sm:$0xff] %v1388
        %1421 = vst [vmem:[%s259 + $0x8] sm:$0xff] %v1389
        %1422 = vst [vmem:[%s259 + $0x10] sm:$0xff] %v1390
        %1423 = vst [vmem:[%s259 + $0x18] sm:$0xff] %v1391
        %1424 = vst [vmem:[%s259 + $0x20] sm:$0xff] %v1392
        %1425 = vst [vmem:[%s259 + $0x28] sm:$0xff] %v1393
        %1426 = vst [vmem:[%s259 + $0x30] sm:$0xff] %v1394
        %1427 = vst [vmem:[%s259 + $0x38] sm:$0xff] %v1395
        %1428 = vst [vmem:[%s259 + $0x40] sm:$0xff] %v1396
        %1429 = vst [vmem:[%s259 + $0x48] sm:$0xff] %v1397
        %1430 = vst [vmem:[%s259 + $0x50] sm:$0xff] %v1398
        %1431 = vst [vmem:[%s259 + $0x58] sm:$0xff] %v1399
        %1432 = vst [vmem:[%s259 + $0x60] sm:$0xff] %v1400
        %1433 = vst [vmem:[%s259 + $0x68] sm:$0xff] %v1401
        %1434 = vst [vmem:[%s259 + $0x70] sm:$0xff] %v1402
        %1435 = vst [vmem:[%s259 + $0x78] sm:$0xff] %v1403
        %1436 = vst [vmem:[%s259 + $0x80] sm:$0xff] %v1404
        %1437 = vst [vmem:[%s259 + $0x88] sm:$0xff] %v1405
        %1438 = vst [vmem:[%s259 + $0x90] sm:$0xff] %v1406
        %1439 = vst [vmem:[%s259 + $0x98] sm:$0xff] %v1407
        %1440 = vst [vmem:[%s259 + $0xa0] sm:$0xff] %v1408
        %1441 = vst [vmem:[%s259 + $0xa8] sm:$0xff] %v1409
        %1442 = vst [vmem:[%s259 + $0xb0] sm:$0xff] %v1410
        %1443 = vst [vmem:[%s259 + $0xb8] sm:$0xff] %v1411
        %1444 = vst [vmem:[%s259 + $0xc0] sm:$0xff] %v1412
        %1445 = vst [vmem:[%s259 + $0xc8] sm:$0xff] %v1413
        %1446 = vst [vmem:[%s259 + $0xd0] sm:$0xff] %v1414
        %1447 = vst [vmem:[%s259 + $0xd8] sm:$0xff] %v1415
        %1448 = vst [vmem:[%s259 + $0xe0] sm:$0xff] %v1416
        %1449 = vst [vmem:[%s259 + $0xe8] sm:$0xff] %v1417
        %1450 = vst [vmem:[%s259 + $0xf0] sm:$0xff] %v1418
        %1451 = vst [vmem:[%s259 + $0xf8] sm:$0xff] %v1419
        %v1452 = vmul.f32 %v1195, %v456
        %v1453 = vmul.f32 %v1195, %v457
        %v1454 = vmul.f32 %v1195, %v458
        %v1455 = vmul.f32 %v1195, %v459
        %v1456 = vmul.f32 %v1195, %v460
        %v1457 = vmul.f32 %v1195, %v461
        %v1458 = vmul.f32 %v1195, %v462
        %v1459 = vmul.f32 %v1195, %v463
        %v1460 = vmul.f32 %v1195, %v464
        %v1461 = vmul.f32 %v1195, %v465
        %v1462 = vmul.f32 %v1195, %v466
        %v1463 = vmul.f32 %v1195, %v467
        %v1464 = vmul.f32 %v1195, %v468
        %v1465 = vmul.f32 %v1195, %v469
        %v1466 = vmul.f32 %v1195, %v470
        %v1467 = vmul.f32 %v1195, %v471
        %v1468 = vmul.f32 %v1195, %v472
        %v1469 = vmul.f32 %v1195, %v473
        %v1470 = vmul.f32 %v1195, %v474
        %v1471 = vmul.f32 %v1195, %v475
        %v1472 = vmul.f32 %v1195, %v476
        %v1473 = vmul.f32 %v1195, %v477
        %v1474 = vmul.f32 %v1195, %v478
        %v1475 = vmul.f32 %v1195, %v479
        %v1476 = vmul.f32 %v1195, %v480
        %v1477 = vmul.f32 %v1195, %v481
        %v1478 = vmul.f32 %v1195, %v482
        %v1479 = vmul.f32 %v1195, %v483
        %v1480 = vmul.f32 %v1195, %v484
        %v1481 = vmul.f32 %v1195, %v485
        %v1482 = vmul.f32 %v1195, %v486
        %v1483 = vmul.f32 %v1195, %v487
        %v1484 = vmul.f32 %v1163, %v423
        %v1485 = vmul.f32 %v1164, %v424
        %v1486 = vmul.f32 %v1165, %v425
        %v1487 = vmul.f32 %v1166, %v426
        %v1488 = vmul.f32 %v1167, %v427
        %v1489 = vmul.f32 %v1168, %v428
        %v1490 = vmul.f32 %v1169, %v429
        %v1491 = vmul.f32 %v1170, %v430
        %v1492 = vmul.f32 %v1171, %v431
        %v1493 = vmul.f32 %v1172, %v432
        %v1494 = vmul.f32 %v1173, %v433
        %v1495 = vmul.f32 %v1174, %v434
        %v1496 = vmul.f32 %v1175, %v435
        %v1497 = vmul.f32 %v1176, %v436
        %v1498 = vmul.f32 %v1177, %v437
        %v1499 = vmul.f32 %v1178, %v438
        %v1500 = vmul.f32 %v1179, %v439
        %v1501 = vmul.f32 %v1180, %v440
        %v1502 = vmul.f32 %v1181, %v441
        %v1503 = vmul.f32 %v1182, %v442
        %v1504 = vmul.f32 %v1183, %v443
        %v1505 = vmul.f32 %v1184, %v444
        %v1506 = vmul.f32 %v1185, %v445
        %v1507 = vmul.f32 %v1186, %v446
        %v1508 = vmul.f32 %v1187, %v447
        %v1509 = vmul.f32 %v1188, %v448
        %v1510 = vmul.f32 %v1189, %v449
        %v1511 = vmul.f32 %v1190, %v450
        %v1512 = vmul.f32 %v1191, %v451
        %v1513 = vmul.f32 %v1192, %v452
        %v1514 = vmul.f32 %v1193, %v453
        %v1515 = vmul.f32 %v1194, %v454
        %v1516 = vadd.f32 %v1452, %v1484
        %v1517 = vadd.f32 %v1453, %v1485
        %v1518 = vadd.f32 %v1454, %v1486
        %v1519 = vadd.f32 %v1455, %v1487
        %v1520 = vadd.f32 %v1456, %v1488
        %v1521 = vadd.f32 %v1457, %v1489
        %v1522 = vadd.f32 %v1458, %v1490
        %v1523 = vadd.f32 %v1459, %v1491
        %v1524 = vadd.f32 %v1460, %v1492
        %v1525 = vadd.f32 %v1461, %v1493
        %v1526 = vadd.f32 %v1462, %v1494
        %v1527 = vadd.f32 %v1463, %v1495
        %v1528 = vadd.f32 %v1464, %v1496
        %v1529 = vadd.f32 %v1465, %v1497
        %v1530 = vadd.f32 %v1466, %v1498
        %v1531 = vadd.f32 %v1467, %v1499
        %v1532 = vadd.f32 %v1468, %v1500
        %v1533 = vadd.f32 %v1469, %v1501
        %v1534 = vadd.f32 %v1470, %v1502
        %v1535 = vadd.f32 %v1471, %v1503
        %v1536 = vadd.f32 %v1472, %v1504
        %v1537 = vadd.f32 %v1473, %v1505
        %v1538 = vadd.f32 %v1474, %v1506
        %v1539 = vadd.f32 %v1475, %v1507
        %v1540 = vadd.f32 %v1476, %v1508
        %v1541 = vadd.f32 %v1477, %v1509
        %v1542 = vadd.f32 %v1478, %v1510
        %v1543 = vadd.f32 %v1479, %v1511
        %v1544 = vadd.f32 %v1480, %v1512
        %v1545 = vadd.f32 %v1481, %v1513
        %v1546 = vadd.f32 %v1482, %v1514
        %v1547 = vadd.f32 %v1483, %v1515
        %1548 = vst [vmem:[%s266] sm:$0xff] %v1516
        %1549 = vst [vmem:[%s266 + $0x8] sm:$0xff] %v1517
        %1550 = vst [vmem:[%s266 + $0x10] sm:$0xff] %v1518
        %1551 = vst [vmem:[%s266 + $0x18] sm:$0xff] %v1519
        %1552 = vst [vmem:[%s266 + $0x20] sm:$0xff] %v1520
        %1553 = vst [vmem:[%s266 + $0x28] sm:$0xff] %v1521
        %1554 = vst [vmem:[%s266 + $0x30] sm:$0xff] %v1522
        %1555 = vst [vmem:[%s266 + $0x38] sm:$0xff] %v1523
        %1556 = vst [vmem:[%s266 + $0x40] sm:$0xff] %v1524
        %1557 = vst [vmem:[%s266 + $0x48] sm:$0xff] %v1525
        %1558 = vst [vmem:[%s266 + $0x50] sm:$0xff] %v1526
        %1559 = vst [vmem:[%s266 + $0x58] sm:$0xff] %v1527
        %1560 = vst [vmem:[%s266 + $0x60] sm:$0xff] %v1528
        %1561 = vst [vmem:[%s266 + $0x68] sm:$0xff] %v1529
        %1562 = vst [vmem:[%s266 + $0x70] sm:$0xff] %v1530
        %1563 = vst [vmem:[%s266 + $0x78] sm:$0xff] %v1531
        %1564 = vst [vmem:[%s266 + $0x80] sm:$0xff] %v1532
        %1565 = vst [vmem:[%s266 + $0x88] sm:$0xff] %v1533
        %1566 = vst [vmem:[%s266 + $0x90] sm:$0xff] %v1534
        %1567 = vst [vmem:[%s266 + $0x98] sm:$0xff] %v1535
        %1568 = vst [vmem:[%s266 + $0xa0] sm:$0xff] %v1536
        %1569 = vst [vmem:[%s266 + $0xa8] sm:$0xff] %v1537
        %1570 = vst [vmem:[%s266 + $0xb0] sm:$0xff] %v1538
        %1571 = vst [vmem:[%s266 + $0xb8] sm:$0xff] %v1539
        %1572 = vst [vmem:[%s266 + $0xc0] sm:$0xff] %v1540
        %1573 = vst [vmem:[%s266 + $0xc8] sm:$0xff] %v1541
        %1574 = vst [vmem:[%s266 + $0xd0] sm:$0xff] %v1542
        %1575 = vst [vmem:[%s266 + $0xd8] sm:$0xff] %v1543
        %1576 = vst [vmem:[%s266 + $0xe0] sm:$0xff] %v1544
        %1577 = vst [vmem:[%s266 + $0xe8] sm:$0xff] %v1545
        %1578 = vst [vmem:[%s266 + $0xf0] sm:$0xff] %v1546
        %1579 = vst [vmem:[%s266 + $0xf8] sm:$0xff] %v1547
        %v1580 = vstv %s290
        %v1581 = vmul.f32 %v1580, %v489
        %v1582 = vmul.f32 %v1580, %v490
        %v1583 = vmul.f32 %v1580, %v491
        %v1584 = vmul.f32 %v1580, %v492
        %v1585 = vmul.f32 %v1580, %v493
        %v1586 = vmul.f32 %v1580, %v494
        %v1587 = vmul.f32 %v1580, %v495
        %v1588 = vmul.f32 %v1580, %v496
        %v1589 = vmul.f32 %v1580, %v497
        %v1590 = vmul.f32 %v1580, %v498
        %v1591 = vmul.f32 %v1580, %v499
        %v1592 = vmul.f32 %v1580, %v500
        %v1593 = vmul.f32 %v1580, %v501
        %v1594 = vmul.f32 %v1580, %v502
        %v1595 = vmul.f32 %v1580, %v503
        %v1596 = vmul.f32 %v1580, %v504
        %v1597 = vmul.f32 %v1580, %v505
        %v1598 = vmul.f32 %v1580, %v506
        %v1599 = vmul.f32 %v1580, %v507
        %v1600 = vmul.f32 %v1580, %v508
        %v1601 = vmul.f32 %v1580, %v509
        %v1602 = vmul.f32 %v1580, %v510
        %v1603 = vmul.f32 %v1580, %v511
        %v1604 = vmul.f32 %v1580, %v512
        %v1605 = vmul.f32 %v1580, %v513
        %v1606 = vmul.f32 %v1580, %v514
        %v1607 = vmul.f32 %v1580, %v515
        %v1608 = vmul.f32 %v1580, %v516
        %v1609 = vmul.f32 %v1580, %v517
        %v1610 = vmul.f32 %v1580, %v518
        %v1611 = vmul.f32 %v1580, %v519
        %v1612 = vmul.f32 %v1580, %v520
        %v1613 = vstv %s287
        %v1614 = vmul.f32 %v1613, %v1324
        %v1615 = vmul.f32 %v1613, %v1325
        %v1616 = vmul.f32 %v1613, %v1326
        %v1617 = vmul.f32 %v1613, %v1327
        %v1618 = vmul.f32 %v1613, %v1328
        %v1619 = vmul.f32 %v1613, %v1329
        %v1620 = vmul.f32 %v1613, %v1330
        %v1621 = vmul.f32 %v1613, %v1331
        %v1622 = vmul.f32 %v1613, %v1332
        %v1623 = vmul.f32 %v1613, %v1333
        %v1624 = vmul.f32 %v1613, %v1334
        %v1625 = vmul.f32 %v1613, %v1335
        %v1626 = vmul.f32 %v1613, %v1336
        %v1627 = vmul.f32 %v1613, %v1337
        %v1628 = vmul.f32 %v1613, %v1338
        %v1629 = vmul.f32 %v1613, %v1339
        %v1630 = vmul.f32 %v1613, %v1340
        %v1631 = vmul.f32 %v1613, %v1341
        %v1632 = vmul.f32 %v1613, %v1342
        %v1633 = vmul.f32 %v1613, %v1343
        %v1634 = vmul.f32 %v1613, %v1344
        %v1635 = vmul.f32 %v1613, %v1345
        %v1636 = vmul.f32 %v1613, %v1346
        %v1637 = vmul.f32 %v1613, %v1347
        %v1638 = vmul.f32 %v1613, %v1348
        %v1639 = vmul.f32 %v1613, %v1349
        %v1640 = vmul.f32 %v1613, %v1350
        %v1641 = vmul.f32 %v1613, %v1351
        %v1642 = vmul.f32 %v1613, %v1352
        %v1643 = vmul.f32 %v1613, %v1353
        %v1644 = vmul.f32 %v1613, %v1354
        %v1645 = vmul.f32 %v1613, %v1355
        %v1646 = vadd.f32 %v1581, %v1614
        %v1647 = vadd.f32 %v1582, %v1615
        %v1648 = vadd.f32 %v1583, %v1616
        %v1649 = vadd.f32 %v1584, %v1617
        %v1650 = vadd.f32 %v1585, %v1618
        %v1651 = vadd.f32 %v1586, %v1619
        %v1652 = vadd.f32 %v1587, %v1620
        %v1653 = vadd.f32 %v1588, %v1621
        %v1654 = vadd.f32 %v1589, %v1622
        %v1655 = vadd.f32 %v1590, %v1623
        %v1656 = vadd.f32 %v1591, %v1624
        %v1657 = vadd.f32 %v1592, %v1625
        %v1658 = vadd.f32 %v1593, %v1626
        %v1659 = vadd.f32 %v1594, %v1627
        %v1660 = vadd.f32 %v1595, %v1628
        %v1661 = vadd.f32 %v1596, %v1629
        %v1662 = vadd.f32 %v1597, %v1630
        %v1663 = vadd.f32 %v1598, %v1631
        %v1664 = vadd.f32 %v1599, %v1632
        %v1665 = vadd.f32 %v1600, %v1633
        %v1666 = vadd.f32 %v1601, %v1634
        %v1667 = vadd.f32 %v1602, %v1635
        %v1668 = vadd.f32 %v1603, %v1636
        %v1669 = vadd.f32 %v1604, %v1637
        %v1670 = vadd.f32 %v1605, %v1638
        %v1671 = vadd.f32 %v1606, %v1639
        %v1672 = vadd.f32 %v1607, %v1640
        %v1673 = vadd.f32 %v1608, %v1641
        %v1674 = vadd.f32 %v1609, %v1642
        %v1675 = vadd.f32 %v1610, %v1643
        %v1676 = vadd.f32 %v1611, %v1644
        %v1677 = vadd.f32 %v1612, %v1645
        %1678 = vst [vmem:[%s273] sm:$0xff] %v1646
        %1679 = vst [vmem:[%s273 + $0x8] sm:$0xff] %v1647
        %1680 = vst [vmem:[%s273 + $0x10] sm:$0xff] %v1648
        %1681 = vst [vmem:[%s273 + $0x18] sm:$0xff] %v1649
        %1682 = vst [vmem:[%s273 + $0x20] sm:$0xff] %v1650
        %1683 = vst [vmem:[%s273 + $0x28] sm:$0xff] %v1651
        %1684 = vst [vmem:[%s273 + $0x30] sm:$0xff] %v1652
        %1685 = vst [vmem:[%s273 + $0x38] sm:$0xff] %v1653
        %1686 = vst [vmem:[%s273 + $0x40] sm:$0xff] %v1654
        %1687 = vst [vmem:[%s273 + $0x48] sm:$0xff] %v1655
        %1688 = vst [vmem:[%s273 + $0x50] sm:$0xff] %v1656
        %1689 = vst [vmem:[%s273 + $0x58] sm:$0xff] %v1657
        %1690 = vst [vmem:[%s273 + $0x60] sm:$0xff] %v1658
        %1691 = vst [vmem:[%s273 + $0x68] sm:$0xff] %v1659
        %1692 = vst [vmem:[%s273 + $0x70] sm:$0xff] %v1660
        %1693 = vst [vmem:[%s273 + $0x78] sm:$0xff] %v1661
        %1694 = vst [vmem:[%s273 + $0x80] sm:$0xff] %v1662
        %1695 = vst [vmem:[%s273 + $0x88] sm:$0xff] %v1663
        %1696 = vst [vmem:[%s273 + $0x90] sm:$0xff] %v1664
        %1697 = vst [vmem:[%s273 + $0x98] sm:$0xff] %v1665
        %1698 = vst [vmem:[%s273 + $0xa0] sm:$0xff] %v1666
        %1699 = vst [vmem:[%s273 + $0xa8] sm:$0xff] %v1667
        %1700 = vst [vmem:[%s273 + $0xb0] sm:$0xff] %v1668
        %1701 = vst [vmem:[%s273 + $0xb8] sm:$0xff] %v1669
        %1702 = vst [vmem:[%s273 + $0xc0] sm:$0xff] %v1670
        %1703 = vst [vmem:[%s273 + $0xc8] sm:$0xff] %v1671
        %1704 = vst [vmem:[%s273 + $0xd0] sm:$0xff] %v1672
        %1705 = vst [vmem:[%s273 + $0xd8] sm:$0xff] %v1673
        %1706 = vst [vmem:[%s273 + $0xe0] sm:$0xff] %v1674
        %1707 = vst [vmem:[%s273 + $0xe8] sm:$0xff] %v1675
        %1708 = vst [vmem:[%s273 + $0xf0] sm:$0xff] %v1676
        %1709 = vst [vmem:[%s273 + $0xf8] sm:$0xff] %v1677
        %v1710 = vstv %s288
        %v1711 = vmul.f32 %v1710, %v489
        %v1712 = vmul.f32 %v1710, %v490
        %v1713 = vmul.f32 %v1710, %v491
        %v1714 = vmul.f32 %v1710, %v492
        %v1715 = vmul.f32 %v1710, %v493
        %v1716 = vmul.f32 %v1710, %v494
        %v1717 = vmul.f32 %v1710, %v495
        %v1718 = vmul.f32 %v1710, %v496
        %v1719 = vmul.f32 %v1710, %v497
        %v1720 = vmul.f32 %v1710, %v498
        %v1721 = vmul.f32 %v1710, %v499
        %v1722 = vmul.f32 %v1710, %v500
        %v1723 = vmul.f32 %v1710, %v501
        %v1724 = vmul.f32 %v1710, %v502
        %v1725 = vmul.f32 %v1710, %v503
        %v1726 = vmul.f32 %v1710, %v504
        %v1727 = vmul.f32 %v1710, %v505
        %v1728 = vmul.f32 %v1710, %v506
        %v1729 = vmul.f32 %v1710, %v507
        %v1730 = vmul.f32 %v1710, %v508
        %v1731 = vmul.f32 %v1710, %v509
        %v1732 = vmul.f32 %v1710, %v510
        %v1733 = vmul.f32 %v1710, %v511
        %v1734 = vmul.f32 %v1710, %v512
        %v1735 = vmul.f32 %v1710, %v513
        %v1736 = vmul.f32 %v1710, %v514
        %v1737 = vmul.f32 %v1710, %v515
        %v1738 = vmul.f32 %v1710, %v516
        %v1739 = vmul.f32 %v1710, %v517
        %v1740 = vmul.f32 %v1710, %v518
        %v1741 = vmul.f32 %v1710, %v519
        %v1742 = vmul.f32 %v1710, %v520
        %v1743 = vadd.f32 %v522, %v1711
        %v1744 = vadd.f32 %v523, %v1712
        %v1745 = vadd.f32 %v524, %v1713
        %v1746 = vadd.f32 %v525, %v1714
        %v1747 = vadd.f32 %v526, %v1715
        %v1748 = vadd.f32 %v527, %v1716
        %v1749 = vadd.f32 %v528, %v1717
        %v1750 = vadd.f32 %v529, %v1718
        %v1751 = vadd.f32 %v530, %v1719
        %v1752 = vadd.f32 %v531, %v1720
        %v1753 = vadd.f32 %v532, %v1721
        %v1754 = vadd.f32 %v533, %v1722
        %v1755 = vadd.f32 %v534, %v1723
        %v1756 = vadd.f32 %v535, %v1724
        %v1757 = vadd.f32 %v536, %v1725
        %v1758 = vadd.f32 %v537, %v1726
        %v1759 = vadd.f32 %v538, %v1727
        %v1760 = vadd.f32 %v539, %v1728
        %v1761 = vadd.f32 %v540, %v1729
        %v1762 = vadd.f32 %v541, %v1730
        %v1763 = vadd.f32 %v542, %v1731
        %v1764 = vadd.f32 %v543, %v1732
        %v1765 = vadd.f32 %v544, %v1733
        %v1766 = vadd.f32 %v545, %v1734
        %v1767 = vadd.f32 %v546, %v1735
        %v1768 = vadd.f32 %v547, %v1736
        %v1769 = vadd.f32 %v548, %v1737
        %v1770 = vadd.f32 %v549, %v1738
        %v1771 = vadd.f32 %v550, %v1739
        %v1772 = vadd.f32 %v551, %v1740
        %v1773 = vadd.f32 %v552, %v1741
        %v1774 = vadd.f32 %v553, %v1742
        %1775 = vst [vmem:[%s280] sm:$0xff] %v1743
        %1776 = vst [vmem:[%s280 + $0x8] sm:$0xff] %v1744
        %1777 = vst [vmem:[%s280 + $0x10] sm:$0xff] %v1745
        %1778 = vst [vmem:[%s280 + $0x18] sm:$0xff] %v1746
        %1779 = vst [vmem:[%s280 + $0x20] sm:$0xff] %v1747
        %1780 = vst [vmem:[%s280 + $0x28] sm:$0xff] %v1748
        %1781 = vst [vmem:[%s280 + $0x30] sm:$0xff] %v1749
        %1782 = vst [vmem:[%s280 + $0x38] sm:$0xff] %v1750
        %1783 = vst [vmem:[%s280 + $0x40] sm:$0xff] %v1751
        %1784 = vst [vmem:[%s280 + $0x48] sm:$0xff] %v1752
        %1785 = vst [vmem:[%s280 + $0x50] sm:$0xff] %v1753
        %1786 = vst [vmem:[%s280 + $0x58] sm:$0xff] %v1754
        %1787 = vst [vmem:[%s280 + $0x60] sm:$0xff] %v1755
        %1788 = vst [vmem:[%s280 + $0x68] sm:$0xff] %v1756
        %1789 = vst [vmem:[%s280 + $0x70] sm:$0xff] %v1757
        %1790 = vst [vmem:[%s280 + $0x78] sm:$0xff] %v1758
        %1791 = vst [vmem:[%s280 + $0x80] sm:$0xff] %v1759
        %1792 = vst [vmem:[%s280 + $0x88] sm:$0xff] %v1760
        %1793 = vst [vmem:[%s280 + $0x90] sm:$0xff] %v1761
        %1794 = vst [vmem:[%s280 + $0x98] sm:$0xff] %v1762
        %1795 = vst [vmem:[%s280 + $0xa0] sm:$0xff] %v1763
        %1796 = vst [vmem:[%s280 + $0xa8] sm:$0xff] %v1764
        %1797 = vst [vmem:[%s280 + $0xb0] sm:$0xff] %v1765
        %1798 = vst [vmem:[%s280 + $0xb8] sm:$0xff] %v1766
        %1799 = vst [vmem:[%s280 + $0xc0] sm:$0xff] %v1767
        %1800 = vst [vmem:[%s280 + $0xc8] sm:$0xff] %v1768
        %1801 = vst [vmem:[%s280 + $0xd0] sm:$0xff] %v1769
        %1802 = vst [vmem:[%s280 + $0xd8] sm:$0xff] %v1770
        %1803 = vst [vmem:[%s280 + $0xe0] sm:$0xff] %v1771
        %1804 = vst [vmem:[%s280 + $0xe8] sm:$0xff] %v1772
        %1805 = vst [vmem:[%s280 + $0xf0] sm:$0xff] %v1773
        %1806 = vst [vmem:[%s280 + $0xf8] sm:$0xff] %v1774
        %s1807 = sand.u32 %s71, 1
        %s1808 = scalar_lea.sflag [#allocation6], %s1807
        %s1809 = sand.u32 %s71, 1
        %s1810 = smul.addr %s1809, 256
        %s1811 = scalar_lea.vmem [#allocation7], %s1810
        %s1812 = sand.u32 %s37, 1
        %s1813 = scalar_lea.sflag [#allocation9], %s1812
        %s1814 = sand.u32 %s97, 1
        %s1815 = smul.addr %s1814, 256
        %s1816 = scalar_lea.vmem [#allocation8], %s1815
        %s1817 = sand.u32 %s37, 1
        %s1818 = scalar_lea.sflag [#allocation9], %s1817
        %s1819 = sand.u32 %s123, 1
        %s1820 = smul.addr %s1819, 256
        %s1821 = scalar_lea.vmem [#allocation10], %s1820
        %s1822 = sand.u32 %s149, 1
        %s1823 = scalar_lea.sflag [#allocation12], %s1822
        %s1824 = sand.u32 %s149, 1
        %s1825 = smul.addr %s1824, 256
        %s1826 = scalar_lea.vmem [#allocation11], %s1825
        // Predicated region
        $region29: #{tpu_custom_call.1} parent=23 // pred_check
          %p1827 = pneg %p81
        $region30: #{tpu_custom_call.1} parent=23 // pred_check_branch
          %1829 = sbr.rel (%p1827) target = $region32
        $region31: #{tpu_custom_call.1} parent=23 // pred_region
          %s1830 = smul.u32 2, %s37
          %1832 = vsyncadd %s1808, 0
          %s1833 = smul.addr %s1830, 16
          %s1834 = smul.addr %s1833, 8
          %s1835 = scalar_lea.hbm %s2, %s1834
          %s1836 = sshll.u32 %s1811, 4
          %s1837 = int_to_ptr.vmem [resolvable:$true] %s1836
          %s1838 = sshll.u32 %s1835, 4
          %s1839 = int_to_ptr.hbm [resolvable:$true] %s1838
          %1844 = dma.vmem_to_hbm [thread:$0]  %s1837, 4096, %s1839, %s1808, 2048, 2048, 128
        $region32: #{tpu_custom_call.1} parent=23 // pred_fallthru
          _
        // Predicated region
        $region33: #{tpu_custom_call.1} parent=23 // pred_check
          %p1845 = pneg %p107
        $region34: #{tpu_custom_call.1} parent=23 // pred_check_branch
          %1847 = sbr.rel (%p1845) target = $region36
        $region35: #{tpu_custom_call.1} parent=23 // pred_region
          %s1848 = smul.u32 2, %s37
          %1850 = vsyncadd %s1813, 0
          %s1851 = smul.addr %s1848, 16
          %s1852 = smul.addr %s1851, 8
          %s1853 = scalar_lea.hbm %s3, %s1852
          %s1854 = sshll.u32 %s1816, 4
          %s1855 = int_to_ptr.vmem [resolvable:$true] %s1854
          %s1856 = sshll.u32 %s1853, 4
          %s1857 = int_to_ptr.hbm [resolvable:$true] %s1856
          %1862 = dma.vmem_to_hbm [thread:$0]  %s1855, 4096, %s1857, %s1813, 2048, 2048, 128
        $region36: #{tpu_custom_call.1} parent=23 // pred_fallthru
          _
        // Predicated region
        $region37: #{tpu_custom_call.1} parent=23 // pred_check
          %p1863 = pneg %p133
        $region38: #{tpu_custom_call.1} parent=23 // pred_check_branch
          %1865 = sbr.rel (%p1863) target = $region40
        $region39: #{tpu_custom_call.1} parent=23 // pred_region
          %s1866 = smul.u32 2, %s37
          %1868 = vsyncadd %s1818, 0
          %s1869 = smul.addr %s1866, 16
          %s1870 = smul.addr %s1869, 8
          %s1871 = scalar_lea.hbm %s4, %s1870
          %s1872 = sshll.u32 %s1821, 4
          %s1873 = int_to_ptr.vmem [resolvable:$true] %s1872
          %s1874 = sshll.u32 %s1871, 4
          %s1875 = int_to_ptr.hbm [resolvable:$true] %s1874
          %1880 = dma.vmem_to_hbm [thread:$0]  %s1873, 4096, %s1875, %s1818, 2048, 2048, 128
        $region40: #{tpu_custom_call.1} parent=23 // pred_fallthru
          _
        // Predicated region
        $region41: #{tpu_custom_call.1} parent=23 // pred_check
          %p1881 = pneg %p159
        $region42: #{tpu_custom_call.1} parent=23 // pred_check_branch
          %1883 = sbr.rel (%p1881) target = $region44
        $region43: #{tpu_custom_call.1} parent=23 // pred_region
          %s1884 = smul.u32 2, %s37
          %1886 = vsyncadd %s1823, 0
          %s1887 = smul.addr %s1884, 16
          %s1888 = smul.addr %s1887, 8
          %s1889 = scalar_lea.hbm %s5, %s1888
          %s1890 = sshll.u32 %s1826, 4
          %s1891 = int_to_ptr.vmem [resolvable:$true] %s1890
          %s1892 = sshll.u32 %s1889, 4
          %s1893 = int_to_ptr.hbm [resolvable:$true] %s1892
          %1898 = dma.vmem_to_hbm [thread:$0]  %s1891, 4096, %s1893, %s1823, 2048, 2048, 128
        $region44: #{tpu_custom_call.1} parent=23 // pred_fallthru
          _
      $region24: #{tpu_custom_call.1} parent=5 // pred_fallthru
        _
      %p1899 = scmp.le.s32.totalorder 2, %s32
      // Predicated region
      $region45: #{tpu_custom_call.1} parent=5 // pred_check
        %p1900 = pneg %p1899
      $region46: #{tpu_custom_call.1} parent=5 // pred_check_branch
        %1902 = sbr.rel (%p1900) target = $region48
      $region47: #{tpu_custom_call.1} parent=5 // pred_region
        %s1903 = ssub.s32 %s32, 2
        // Predicated region
        $region49: #{tpu_custom_call.1} parent=47 // pred_check
          %p1904 = pneg %p87
        $region50: #{tpu_custom_call.1} parent=47 // pred_check_branch
          %1906 = sbr.rel (%p1904) target = $region52
        $region51: #{tpu_custom_call.1} parent=47 // pred_region
          %s1907 = sand.u32 %s72, 1
          %s1908 = scalar_lea.sflag [#allocation6], %s1907
          %s1909 = sand.u32 %s72, 1
          %s1910 = smul.addr %s1909, 256
          %s1911 = scalar_lea.vmem [#allocation7], %s1910
          %1913 = dma.done %s1908, 4096
        $region52: #{tpu_custom_call.1} parent=47 // pred_fallthru
          _
        // Predicated region
        $region53: #{tpu_custom_call.1} parent=47 // pred_check
          %p1914 = pneg %p113
        $region54: #{tpu_custom_call.1} parent=47 // pred_check_branch
          %1916 = sbr.rel (%p1914) target = $region56
        $region55: #{tpu_custom_call.1} parent=47 // pred_region
          %s1917 = sand.u32 %s38, 1
          %s1918 = scalar_lea.sflag [#allocation9], %s1917
          %s1919 = sand.u32 %s98, 1
          %s1920 = smul.addr %s1919, 256
          %s1921 = scalar_lea.vmem [#allocation8], %s1920
          %1923 = dma.done %s1918, 4096
        $region56: #{tpu_custom_call.1} parent=47 // pred_fallthru
          _
        // Predicated region
        $region57: #{tpu_custom_call.1} parent=47 // pred_check
          %p1924 = pneg %p139
        $region58: #{tpu_custom_call.1} parent=47 // pred_check_branch
          %1926 = sbr.rel (%p1924) target = $region60
        $region59: #{tpu_custom_call.1} parent=47 // pred_region
          %s1927 = sand.u32 %s38, 1
          %s1928 = scalar_lea.sflag [#allocation9], %s1927
          %s1929 = sand.u32 %s124, 1
          %s1930 = smul.addr %s1929, 256
          %s1931 = scalar_lea.vmem [#allocation10], %s1930
          %1933 = dma.done %s1928, 4096
        $region60: #{tpu_custom_call.1} parent=47 // pred_fallthru
          _
        // Predicated region
        $region61: #{tpu_custom_call.1} parent=47 // pred_check
          %p1934 = pneg %p165
        $region62: #{tpu_custom_call.1} parent=47 // pred_check_branch
          %1936 = sbr.rel (%p1934) target = $region64
        $region63: #{tpu_custom_call.1} parent=47 // pred_region
          %s1937 = sand.u32 %s150, 1
          %s1938 = scalar_lea.sflag [#allocation12], %s1937
          %s1939 = sand.u32 %s150, 1
          %s1940 = smul.addr %s1939, 256
          %s1941 = scalar_lea.vmem [#allocation11], %s1940
          %1943 = dma.done %s1938, 4096
        $region64: #{tpu_custom_call.1} parent=47 // pred_fallthru
          _
      $region48: #{tpu_custom_call.1} parent=5 // pred_fallthru
        _
    $region6: #{tpu_custom_call.1} parent=1 // loop_footer
      %s36 = sadd.s32 1, %s32
    $region7: #{tpu_custom_call.1} parent=1 // loop_footer_branch
      %31 = sbr.rel target = $region3
    $region8: #{tpu_custom_call.1} parent=1 // loop_exit
      _
    %1944 = vsyncpa [#allocation5], 1
    %s1945 = scalar_lea.sflag [#allocation5], 1
    %1946 = vsyncpa %s1945, 1
    %1947 = vsyncpa [#allocation6], 1
    %s1948 = scalar_lea.sflag [#allocation6], 1
    %1949 = vsyncpa %s1948, 1
    %1950 = vsyncpa [#allocation9], 1
    %s1951 = scalar_lea.sflag [#allocation9], 1
    %1952 = vsyncpa %s1951, 1
    %1953 = vsyncpa [#allocation12], 1
    %s1954 = scalar_lea.sflag [#allocation12], 1
    %1955 = vsyncpa %s1954, 1

</llo_original>
